<compile_context>
chip_gen: v7x
topology: tpu7x:2x2x1
jax: 0.10.0
libtpu: 0.0.40
codegen_flags: <defaults>
</compile_context>

<pallas_src>
import functools

import jax
import jax.numpy as jnp
import numpy as np
from jax.experimental import pallas as pl
from jax.experimental.pallas import tpu as pltpu

NEG_INF = -1e9  # large finite negative; exp() underflows to 0 exactly in f32


# --------------------------------------------------------------------------
# Kernel
# --------------------------------------------------------------------------
def _mcc_decoder_block_kernel(
    x_ref,        # (1, N, C)  f32
    mask_ref,     # (N, N)     f32 additive mask (0 / -1e9)
    wqkv_ref,     # (C, 3C)    bf16, attention scale folded into the Q slice
    wp_ref,       # (C, C)     bf16
    w1_ref,       # (C, Hid)   bf16
    w2_ref,       # (Hid, C)   bf16
    vecs_ref,     # (8, C)     f32: ln1_w, ln1_b, bp, g1, ln2_w, ln2_b, b2, g2
    b1_ref,       # (1, Hid)   f32
    out_ref,      # (1, N, C)
    *, num_heads: int, eps: float,
):
    f32 = jnp.float32
    bf16 = jnp.bfloat16

    x = x_ref[0].astype(f32)                     # (N, C)
    n_tok, dim = x.shape
    hd = dim // num_heads

    vecs = vecs_ref[...].astype(f32)             # (8, C)
    ln1_w, ln1_b = vecs[0:1, :], vecs[1:2, :]
    bp, g1 = vecs[2:3, :], vecs[3:4, :]
    ln2_w, ln2_b = vecs[4:5, :], vecs[5:6, :]
    b2, g2 = vecs[6:7, :], vecs[7:8, :]
    b1 = b1_ref[...].astype(f32)                 # (1, Hid)

    # ------------------- norm1 ---------------------------------------------
    mu1 = jnp.mean(x, axis=-1, keepdims=True)
    var1 = jnp.mean(jnp.square(x - mu1), axis=-1, keepdims=True)
    xn = (x - mu1) * jax.lax.rsqrt(var1 + eps) * ln1_w + ln1_b

    # ------------------- fused QKV projection (one bf16 matmul) ------------
    qkv = jnp.dot(xn.astype(bf16), wqkv_ref[...],
                  preferred_element_type=f32)    # (N, 3C), f32 accumulate
    q = qkv[:, :dim]                             # scale already folded in
    k = qkv[:, dim:2 * dim]
    v = qkv[:, 2 * dim:].astype(bf16)

    # ------------------- per-head scores, one batched softmax --------------
    scores = [
        jax.lax.dot_general(q[:, h * hd:(h + 1) * hd],
                            k[:, h * hd:(h + 1) * hd],
                            (((1,), (1,)), ((), ())),
                            preferred_element_type=f32)      # (N, N)
        for h in range(num_heads)
    ]
    s = jnp.stack(scores, axis=0) + mask_ref[...][None]      # (H, N, N)
    m = jnp.max(s, axis=-1, keepdims=True)
    p = jnp.exp(s - m)
    p = p * pl.reciprocal(jnp.sum(p, axis=-1, keepdims=True), approx=True)
    p = p.astype(bf16)

    # ------------------- attn @ v, single output projection ----------------
    o = jnp.concatenate(
        [jnp.dot(p[h], v[:, h * hd:(h + 1) * hd], preferred_element_type=f32)
         for h in range(num_heads)], axis=-1)                # (N, C)
    attn_out = jnp.dot(o.astype(bf16), wp_ref[...],
                       preferred_element_type=f32) + bp

    # ------------------- residual 1 + LayerScale (ls1) ---------------------
    y = x + g1 * attn_out

    # ------------------- norm2 ----------------------------------------------
    mu2 = jnp.mean(y, axis=-1, keepdims=True)
    var2 = jnp.mean(jnp.square(y - mu2), axis=-1, keepdims=True)
    yn = (y - mu2) * jax.lax.rsqrt(var2 + eps) * ln2_w + ln2_b

    # ------------------- MLP: fc1 -> GELU -> fc2 ----------------------------
    h1 = jnp.dot(yn.astype(bf16), w1_ref[...], preferred_element_type=f32) + b1
    # TODO(synk): PyTorch nn.GELU defaults to the exact erf form; the tanh
    # approximation is used here for a guaranteed TPU (EUP) lowering.
    c0 = 0.7978845608028654  # sqrt(2/pi)
    h1 = 0.5 * h1 * (1.0 + jnp.tanh(c0 * (h1 + 0.044715 * h1 * h1 * h1)))
    h2 = jnp.dot(h1.astype(bf16), w2_ref[...], preferred_element_type=f32) + b2

    # ------------------- residual 2 + LayerScale (ls2) ----------------------
    out = y + g2 * h2
    out_ref[0] = out.astype(out_ref.dtype)


# --------------------------------------------------------------------------
# Wrapper
# --------------------------------------------------------------------------
def mcc_decoder_block(x, mask, params, *, num_heads, eps=1e-5):
    batch, n_tok, dim = x.shape
    assert dim % num_heads == 0, "dim must be divisible by num_heads"
    head_dim = dim // num_heads
    hidden = params["w1"].shape[1]
    scale = head_dim ** (-0.5)

    # Fused QKV weight (attention scale folded into Q); bf16 MXU operands.
    wqkv = jnp.concatenate(
        [params["wq"] * scale, params["wk"], params["wv"]], axis=1
    ).astype(jnp.bfloat16)                                   # (C, 3C)
    wp = params["wp"].astype(jnp.bfloat16)                   # (C, C)
    w1 = params["w1"].astype(jnp.bfloat16)                   # (C, Hid)
    w2 = params["w2"].astype(jnp.bfloat16)                   # (Hid, C)

    # Pack the dim-length row parameters into one slab; b1 separately.
    vecs = jnp.stack(
        [params["ln1_w"], params["ln1_b"], params["bp"], params["g1"],
         params["ln2_w"], params["ln2_b"], params["b2"], params["g2"]],
        axis=0).astype(jnp.float32)                          # (8, C)
    b1_row = params["b1"].reshape(1, hidden).astype(jnp.float32)

    inputs = (x, mask, wqkv, wp, w1, w2, vecs, b1_row)

    def shared(a):  # full-array block, resident across the batch grid axis
        shp = a.shape
        return pl.BlockSpec(shp, lambda b: (0,) * len(shp))

    in_specs = [
        pl.BlockSpec((1, n_tok, dim), lambda b: (b, 0, 0)),   # x: one sample/step
        shared(mask), shared(wqkv), shared(wp), shared(w1), shared(w2),
        shared(vecs), shared(b1_row),
    ]
    out_spec = pl.BlockSpec((1, n_tok, dim), lambda b: (b, 0, 0))

    flops = int(batch * (
        2 * n_tok * dim * (3 * dim)          # fused qkv
        + 2 * n_tok * n_tok * dim            # q@k^T (all heads)
        + 2 * n_tok * n_tok * dim            # attn@v (all heads)
        + 2 * n_tok * dim * dim              # output projection
        + 2 * 2 * n_tok * dim * hidden       # MLP fc1 + fc2
    ))
    transcendentals = int(batch * (num_heads * n_tok * n_tok + n_tok * hidden))
    bytes_accessed = int(
        sum(int(np.prod(a.shape)) * a.dtype.itemsize for a in inputs)
        + batch * n_tok * dim * x.dtype.itemsize
    )

    kernel = functools.partial(
        _mcc_decoder_block_kernel, num_heads=num_heads, eps=eps)

    return pl.pallas_call(
        kernel,
        out_shape=jax.ShapeDtypeStruct((batch, n_tok, dim), x.dtype),
        grid_spec=pltpu.PrefetchScalarGridSpec(
            num_scalar_prefetch=0,
            grid=(batch,),
            in_specs=in_specs,
            out_specs=out_spec,
        ),
        compiler_params=pltpu.CompilerParams(
            dimension_semantics=("parallel",),        # shards over 2 TCs on v7x
            vmem_limit_bytes=32 * 1024 * 1024,
        ),
        cost_estimate=pl.CostEstimate(
            flops=flops,
            transcendentals=transcendentals,
            bytes_accessed=bytes_accessed,
        ),
    )(*inputs)


# --------------------------------------------------------------------------
# Host-side mask construction (exact replica of the PyTorch Python loops,
# with -1e9 instead of -inf for NaN safety).
# --------------------------------------------------------------------------
def build_mcc_attention_mask(n_tok, patch_idx, point_idx):
    patch_idx = np.asarray(patch_idx)
    point_idx = np.asarray(point_idx)
    q_size = int(point_idx.shape[0])
    mask = np.zeros((n_tok, n_tok), dtype=np.float32)
    mask[:, -q_size:] = NEG_INF
    for i in range(q_size):
        mask[-(i + 1), -(i + 1)] = 0.0
    mask[-q_size:, :-q_size] = NEG_INF
    mask[np.arange(q_size) + n_tok - q_size, point_idx] = 0.0
    n_patches = int(patch_idx.max()) + 1
    for obj in range(n_patches):
        pts = np.nonzero(point_idx == obj)[0]
        patch = np.nonzero(patch_idx == obj)[0]
        patch_min = int(patch.min()) + n_patches
        patch_max = int(patch.max()) + n_patches
        mask[pts + n_tok - q_size, patch_min:patch_max + 1] = 0.0
    return jnp.asarray(mask)


# --------------------------------------------------------------------------
# Pure-JAX f32 reference (same math as the PyTorch module, per sample).
# --------------------------------------------------------------------------
def ref_mcc_decoder_block(x, mask, params, *, num_heads, eps=1e-5):
    n_tok, dim = x.shape
    head_dim = dim // num_heads
    scale = head_dim ** (-0.5)

    def layer_norm(z, w, b):
        mu = jnp.mean(z, axis=-1, keepdims=True)
        var = jnp.mean(jnp.square(z - mu), axis=-1, keepdims=True)
        return (z - mu) / jnp.sqrt(var + eps) * w + b

    xn = layer_norm(x, params["ln1_w"], params["ln1_b"])
    q = (xn @ params["wq"]).reshape(n_tok, num_heads, head_dim).transpose(1, 0, 2)
    k = (xn @ params["wk"]).reshape(n_tok, num_heads, head_dim).transpose(1, 0, 2)
    v = (xn @ params["wv"]).reshape(n_tok, num_heads, head_dim).transpose(1, 0, 2)
    attn = jnp.einsum("hqd,hkd->hqk", q, k) * scale + mask[None]
    attn = jax.nn.softmax(attn, axis=-1)
    a = jnp.einsum("hqk,hkd->hqd", attn, v).transpose(1, 0, 2).reshape(n_tok, dim)
    a = a @ params["wp"] + params["bp"]
    y = x + params["g1"] * a

    yn = layer_norm(y, params["ln2_w"], params["ln2_b"])
    h = yn @ params["w1"] + params["b1"]
    c0 = 0.7978845608028654
    h = 0.5 * h * (1.0 + jnp.tanh(c0 * (h + 0.044715 * h * h * h)))
    h = h @ params["w2"] + params["b2"]
    return y + params["g2"] * h


# --------------------------------------------------------------------------
if __name__ == "__main__":
    dim = 32
    num_heads = 8
    mlp_ratio = 4.0
    hidden = int(dim * mlp_ratio)          # 128
    init_values = 1e-5                     # LayerScale init -> ls1/ls2 active
    batch = 4                              # independent samples, one per grid step

    # Token layout used by MCCDecoderAttention:
    #   [n_objects object tokens | patch tokens | query tokens]
    patch_idx = np.array([0, 0, 0, 0, 1, 1, 1, 1], dtype=np.int32)   # 8 patch tokens
    point_idx = np.array([0, 0, 0, 1, 1, 1], dtype=np.int32)         # 6 query tokens
    n_objects = int(patch_idx.max()) + 1
    n_tok = n_objects + patch_idx.shape[0] + point_idx.shape[0]      # 16

    key = jax.random.PRNGKey(0)
    keys = jax.random.split(key, 14)
    w = lambda k, shp: 0.1 * jax.random.normal(k, shp, dtype=jnp.float32)

    x = jax.random.normal(keys[0], (batch, n_tok, dim), dtype=jnp.float32)
    params = dict(
        ln1_w=1.0 + w(keys[1], (dim,)), ln1_b=w(keys[2], (dim,)),
        wq=w(keys[3], (dim, dim)), wk=w(keys[4], (dim, dim)), wv=w(keys[5], (dim, dim)),
        wp=w(keys[6], (dim, dim)), bp=w(keys[7], (dim,)),
        g1=init_values * jnp.ones((dim,), jnp.float32),
        ln2_w=1.0 + w(keys[8], (dim,)), ln2_b=w(keys[9], (dim,)),
        w1=w(keys[10], (dim, hidden)), b1=w(keys[11], (hidden,)),
        w2=w(keys[12], (hidden, dim)), b2=w(keys[13], (dim,)),
        g2=init_values * jnp.ones((dim,), jnp.float32),
    )

    mask = build_mcc_attention_mask(n_tok, patch_idx, point_idx)

    def ref_batched(xb, prm):
        return jax.vmap(
            lambda xi: ref_mcc_decoder_block(xi, mask, prm, num_heads=num_heads)
        )(xb)

    # Check 1: faithful module config (LayerScale gamma = 1e-5); branch
    # contributions are down-scaled so the bf16 matmul rounding is negligible.
    out = mcc_decoder_block(x, mask, params, num_heads=num_heads)
    jax.block_until_ready(out)
    ref = ref_batched(x, params)
    assert out.shape == x.shape and out.dtype == x.dtype
    assert jnp.allclose(out, ref, atol=5e-6, rtol=1e-5), \
        float(jnp.max(jnp.abs(out - ref)))

    # Check 2: gamma = 1 so the attention / MLP branches dominate the output.
    # Looser tolerance for bf16 MXU operands + approx reciprocal vs f32 ref.
    params_g1 = dict(params,
                     g1=jnp.ones((dim,), jnp.float32),
                     g2=jnp.ones((dim,), jnp.float32))
    out1 = mcc_decoder_block(x, mask, params_g1, num_heads=num_heads)
    jax.block_until_ready(out1)
    ref1 = ref_batched(x, params_g1)
    assert jnp.allclose(out1, ref1, atol=5e-2, rtol=5e-2), \
        float(jnp.max(jnp.abs(out1 - ref1)))

    print("KERNEL_OK")
</pallas_src>

<mosaic_0001>
module attributes {stable_mosaic.version = 11 : i64} {
  func.func @_mcc_decoder_block_kernel(%arg0: i32, %arg1: memref<1x16x32xf32, #tpu.memory_space<vmem>>, %arg2: memref<16x16xf32, #tpu.memory_space<vmem>>, %arg3: memref<32x96xbf16, #tpu.memory_space<vmem>>, %arg4: memref<32x32xbf16, #tpu.memory_space<vmem>>, %arg5: memref<32x128xbf16, #tpu.memory_space<vmem>>, %arg6: memref<128x32xbf16, #tpu.memory_space<vmem>>, %arg7: memref<8x32xf32, #tpu.memory_space<vmem>>, %arg8: memref<1x128xf32, #tpu.memory_space<vmem>>, %arg9: memref<1x16x32xf32, #tpu.memory_space<vmem>>) attributes {dimension_semantics = [#tpu.dimension_semantics<parallel>], iteration_bounds = array<i64: 4>, scalar_prefetch = 0 : i64, scratch_operands = 0 : i64, tpu.core_type = #tpu.core_type<tc>, window_params = [{transform_indices = @transform_0, window_bounds = array<i64: 1, 16, 32>}, {pipeline_mode = #tpu.pipeline_mode<synchronous>, transform_indices = @transform_1, window_bounds = array<i64: 16, 16>}, {pipeline_mode = #tpu.pipeline_mode<synchronous>, transform_indices = @transform_2, window_bounds = array<i64: 32, 96>}, {pipeline_mode = #tpu.pipeline_mode<synchronous>, transform_indices = @transform_3, window_bounds = array<i64: 32, 32>}, {pipeline_mode = #tpu.pipeline_mode<synchronous>, transform_indices = @transform_4, window_bounds = array<i64: 32, 128>}, {pipeline_mode = #tpu.pipeline_mode<synchronous>, transform_indices = @transform_5, window_bounds = array<i64: 128, 32>}, {pipeline_mode = #tpu.pipeline_mode<synchronous>, transform_indices = @transform_6, window_bounds = array<i64: 8, 32>}, {pipeline_mode = #tpu.pipeline_mode<synchronous>, transform_indices = @transform_7, window_bounds = array<i64: 1, 128>}, {transform_indices = @transform_8, window_bounds = array<i64: 1, 16, 32>}]} {
    %c0 = arith.constant 0 : index
    %c0_0 = arith.constant 0 : index
    %c0_1 = arith.constant 0 : index
    %0 = vector.load %arg1[%c0, %c0_0, %c0_1] : memref<1x16x32xf32, #tpu.memory_space<vmem>>, vector<1x16x32xf32>
    %1 = vector.shape_cast %0 : vector<1x16x32xf32> to vector<16x32xf32>
    %c0_2 = arith.constant 0 : index
    %c0_3 = arith.constant 0 : index
    %2 = vector.load %arg7[%c0_2, %c0_3] : memref<8x32xf32, #tpu.memory_space<vmem>>, vector<8x32xf32>
    %3 = vector.extract_strided_slice %2 {offsets = [0, 0], sizes = [1, 32], strides = [1, 1]} : vector<8x32xf32> to vector<1x32xf32>
    %4 = vector.extract_strided_slice %2 {offsets = [1, 0], sizes = [1, 32], strides = [1, 1]} : vector<8x32xf32> to vector<1x32xf32>
    %5 = vector.extract_strided_slice %2 {offsets = [2, 0], sizes = [1, 32], strides = [1, 1]} : vector<8x32xf32> to vector<1x32xf32>
    %6 = vector.extract_strided_slice %2 {offsets = [3, 0], sizes = [1, 32], strides = [1, 1]} : vector<8x32xf32> to vector<1x32xf32>
    %7 = vector.extract_strided_slice %2 {offsets = [4, 0], sizes = [1, 32], strides = [1, 1]} : vector<8x32xf32> to vector<1x32xf32>
    %8 = vector.extract_strided_slice %2 {offsets = [5, 0], sizes = [1, 32], strides = [1, 1]} : vector<8x32xf32> to vector<1x32xf32>
    %9 = vector.extract_strided_slice %2 {offsets = [6, 0], sizes = [1, 32], strides = [1, 1]} : vector<8x32xf32> to vector<1x32xf32>
    %10 = vector.extract_strided_slice %2 {offsets = [7, 0], sizes = [1, 32], strides = [1, 1]} : vector<8x32xf32> to vector<1x32xf32>
    %c0_4 = arith.constant 0 : index
    %c0_5 = arith.constant 0 : index
    %11 = vector.load %arg8[%c0_4, %c0_5] : memref<1x128xf32, #tpu.memory_space<vmem>>, vector<1x128xf32>
    %cst = arith.constant dense<0.000000e+00> : vector<16xf32>
    %12 = vector.multi_reduction <add>, %1, %cst [1] : vector<16x32xf32> to vector<16xf32>
    %13 = vector.shape_cast %12 : vector<16xf32> to vector<16x1xf32>
    %cst_6 = arith.constant 3.200000e+01 : f32
    %14 = vector.broadcast %cst_6 : f32 to vector<16x1xf32>
    %15 = arith.divf %13, %14 : vector<16x1xf32>
    %16 = vector.broadcast %15 : vector<16x1xf32> to vector<16x32xf32>
    %17 = arith.subf %1, %16 : vector<16x32xf32>
    %18 = arith.mulf %17, %17 : vector<16x32xf32>
    %cst_7 = arith.constant dense<0.000000e+00> : vector<16xf32>
    %19 = vector.multi_reduction <add>, %18, %cst_7 [1] : vector<16x32xf32> to vector<16xf32>
    %20 = vector.shape_cast %19 : vector<16xf32> to vector<16x1xf32>
    %cst_8 = arith.constant 3.200000e+01 : f32
    %21 = vector.broadcast %cst_8 : f32 to vector<16x1xf32>
    %22 = arith.divf %20, %21 : vector<16x1xf32>
    %23 = vector.broadcast %15 : vector<16x1xf32> to vector<16x32xf32>
    %24 = arith.subf %1, %23 : vector<16x32xf32>
    %cst_9 = arith.constant 9.99999974E-6 : f32
    %25 = vector.broadcast %cst_9 : f32 to vector<16x1xf32>
    %26 = arith.addf %22, %25 : vector<16x1xf32>
    %27 = math.rsqrt %26 : vector<16x1xf32>
    %28 = vector.broadcast %27 : vector<16x1xf32> to vector<16x32xf32>
    %29 = arith.mulf %24, %28 : vector<16x32xf32>
    %30 = vector.broadcast %3 : vector<1x32xf32> to vector<16x32xf32>
    %31 = arith.mulf %29, %30 : vector<16x32xf32>
    %32 = vector.broadcast %4 : vector<1x32xf32> to vector<16x32xf32>
    %33 = arith.addf %31, %32 : vector<16x32xf32>
    %34 = arith.truncf %33 : vector<16x32xf32> to vector<16x32xbf16>
    %c0_10 = arith.constant 0 : index
    %c0_11 = arith.constant 0 : index
    %35 = vector.load %arg3[%c0_10, %c0_11] : memref<32x96xbf16, #tpu.memory_space<vmem>>, vector<32x96xbf16>
    %cst_12 = arith.constant dense<0.000000e+00> : vector<16x96xf32>
    %36 = tpu.matmul %34, %35, %cst_12 {dimension_numbers = #tpu.dot_dimension_numbers<[1], [0], [0], [1], [0, 0, 1, 1], [], []>} : vector<16x32xbf16>, vector<32x96xbf16>, vector<16x96xf32> -> vector<16x96xf32>
    %37 = vector.extract_strided_slice %36 {offsets = [0, 0], sizes = [16, 32], strides = [1, 1]} : vector<16x96xf32> to vector<16x32xf32>
    %38 = vector.extract_strided_slice %36 {offsets = [0, 32], sizes = [16, 32], strides = [1, 1]} : vector<16x96xf32> to vector<16x32xf32>
    %39 = vector.extract_strided_slice %36 {offsets = [0, 64], sizes = [16, 32], strides = [1, 1]} : vector<16x96xf32> to vector<16x32xf32>
    %40 = arith.truncf %39 : vector<16x32xf32> to vector<16x32xbf16>
    %41 = vector.extract_strided_slice %37 {offsets = [0, 0], sizes = [16, 4], strides = [1, 1]} : vector<16x32xf32> to vector<16x4xf32>
    %42 = vector.extract_strided_slice %38 {offsets = [0, 0], sizes = [16, 4], strides = [1, 1]} : vector<16x32xf32> to vector<16x4xf32>
    %cst_13 = arith.constant dense<0.000000e+00> : vector<16x16xf32>
    %43 = tpu.matmul %41, %42, %cst_13 {dimension_numbers = #tpu.dot_dimension_numbers<[1], [1], [0], [0], [0, 0, 1, 0], [], []>} : vector<16x4xf32>, vector<16x4xf32>, vector<16x16xf32> -> vector<16x16xf32>
    %44 = vector.extract_strided_slice %37 {offsets = [0, 4], sizes = [16, 4], strides = [1, 1]} : vector<16x32xf32> to vector<16x4xf32>
    %45 = vector.extract_strided_slice %38 {offsets = [0, 4], sizes = [16, 4], strides = [1, 1]} : vector<16x32xf32> to vector<16x4xf32>
    %cst_14 = arith.constant dense<0.000000e+00> : vector<16x16xf32>
    %46 = tpu.matmul %44, %45, %cst_14 {dimension_numbers = #tpu.dot_dimension_numbers<[1], [1], [0], [0], [0, 0, 1, 0], [], []>} : vector<16x4xf32>, vector<16x4xf32>, vector<16x16xf32> -> vector<16x16xf32>
    %47 = vector.extract_strided_slice %37 {offsets = [0, 8], sizes = [16, 4], strides = [1, 1]} : vector<16x32xf32> to vector<16x4xf32>
    %48 = vector.extract_strided_slice %38 {offsets = [0, 8], sizes = [16, 4], strides = [1, 1]} : vector<16x32xf32> to vector<16x4xf32>
    %cst_15 = arith.constant dense<0.000000e+00> : vector<16x16xf32>
    %49 = tpu.matmul %47, %48, %cst_15 {dimension_numbers = #tpu.dot_dimension_numbers<[1], [1], [0], [0], [0, 0, 1, 0], [], []>} : vector<16x4xf32>, vector<16x4xf32>, vector<16x16xf32> -> vector<16x16xf32>
    %50 = vector.extract_strided_slice %37 {offsets = [0, 12], sizes = [16, 4], strides = [1, 1]} : vector<16x32xf32> to vector<16x4xf32>
    %51 = vector.extract_strided_slice %38 {offsets = [0, 12], sizes = [16, 4], strides = [1, 1]} : vector<16x32xf32> to vector<16x4xf32>
    %cst_16 = arith.constant dense<0.000000e+00> : vector<16x16xf32>
    %52 = tpu.matmul %50, %51, %cst_16 {dimension_numbers = #tpu.dot_dimension_numbers<[1], [1], [0], [0], [0, 0, 1, 0], [], []>} : vector<16x4xf32>, vector<16x4xf32>, vector<16x16xf32> -> vector<16x16xf32>
    %53 = vector.extract_strided_slice %37 {offsets = [0, 16], sizes = [16, 4], strides = [1, 1]} : vector<16x32xf32> to vector<16x4xf32>
    %54 = vector.extract_strided_slice %38 {offsets = [0, 16], sizes = [16, 4], strides = [1, 1]} : vector<16x32xf32> to vector<16x4xf32>
    %cst_17 = arith.constant dense<0.000000e+00> : vector<16x16xf32>
    %55 = tpu.matmul %53, %54, %cst_17 {dimension_numbers = #tpu.dot_dimension_numbers<[1], [1], [0], [0], [0, 0, 1, 0], [], []>} : vector<16x4xf32>, vector<16x4xf32>, vector<16x16xf32> -> vector<16x16xf32>
    %56 = vector.extract_strided_slice %37 {offsets = [0, 20], sizes = [16, 4], strides = [1, 1]} : vector<16x32xf32> to vector<16x4xf32>
    %57 = vector.extract_strided_slice %38 {offsets = [0, 20], sizes = [16, 4], strides = [1, 1]} : vector<16x32xf32> to vector<16x4xf32>
    %cst_18 = arith.constant dense<0.000000e+00> : vector<16x16xf32>
    %58 = tpu.matmul %56, %57, %cst_18 {dimension_numbers = #tpu.dot_dimension_numbers<[1], [1], [0], [0], [0, 0, 1, 0], [], []>} : vector<16x4xf32>, vector<16x4xf32>, vector<16x16xf32> -> vector<16x16xf32>
    %59 = vector.extract_strided_slice %37 {offsets = [0, 24], sizes = [16, 4], strides = [1, 1]} : vector<16x32xf32> to vector<16x4xf32>
    %60 = vector.extract_strided_slice %38 {offsets = [0, 24], sizes = [16, 4], strides = [1, 1]} : vector<16x32xf32> to vector<16x4xf32>
    %cst_19 = arith.constant dense<0.000000e+00> : vector<16x16xf32>
    %61 = tpu.matmul %59, %60, %cst_19 {dimension_numbers = #tpu.dot_dimension_numbers<[1], [1], [0], [0], [0, 0, 1, 0], [], []>} : vector<16x4xf32>, vector<16x4xf32>, vector<16x16xf32> -> vector<16x16xf32>
    %62 = vector.extract_strided_slice %37 {offsets = [0, 28], sizes = [16, 4], strides = [1, 1]} : vector<16x32xf32> to vector<16x4xf32>
    %63 = vector.extract_strided_slice %38 {offsets = [0, 28], sizes = [16, 4], strides = [1, 1]} : vector<16x32xf32> to vector<16x4xf32>
    %cst_20 = arith.constant dense<0.000000e+00> : vector<16x16xf32>
    %64 = tpu.matmul %62, %63, %cst_20 {dimension_numbers = #tpu.dot_dimension_numbers<[1], [1], [0], [0], [0, 0, 1, 0], [], []>} : vector<16x4xf32>, vector<16x4xf32>, vector<16x16xf32> -> vector<16x16xf32>
    %65 = vector.shape_cast %43 : vector<16x16xf32> to vector<1x16x16xf32>
    %66 = vector.shape_cast %46 : vector<16x16xf32> to vector<1x16x16xf32>
    %67 = vector.shape_cast %49 : vector<16x16xf32> to vector<1x16x16xf32>
    %68 = vector.shape_cast %52 : vector<16x16xf32> to vector<1x16x16xf32>
    %69 = vector.shape_cast %55 : vector<16x16xf32> to vector<1x16x16xf32>
    %70 = vector.shape_cast %58 : vector<16x16xf32> to vector<1x16x16xf32>
    %71 = vector.shape_cast %61 : vector<16x16xf32> to vector<1x16x16xf32>
    %72 = vector.shape_cast %64 : vector<16x16xf32> to vector<1x16x16xf32>
    %73 = tpu.concatenate %65, %66, %67, %68, %69, %70, %71, %72 in 0 : vector<1x16x16xf32>, vector<1x16x16xf32>, vector<1x16x16xf32>, vector<1x16x16xf32>, vector<1x16x16xf32>, vector<1x16x16xf32>, vector<1x16x16xf32>, vector<1x16x16xf32> -> vector<8x16x16xf32>
    %c0_21 = arith.constant 0 : index
    %c0_22 = arith.constant 0 : index
    %74 = vector.load %arg2[%c0_21, %c0_22] : memref<16x16xf32, #tpu.memory_space<vmem>>, vector<16x16xf32>
    %75 = vector.shape_cast %74 : vector<16x16xf32> to vector<1x16x16xf32>
    %76 = vector.broadcast %75 : vector<1x16x16xf32> to vector<8x16x16xf32>
    %77 = arith.addf %73, %76 : vector<8x16x16xf32>
    %cst_23 = arith.constant dense<0xFF800000> : vector<8x16xf32>
    %78 = vector.multi_reduction <maximumf>, %77, %cst_23 [2] : vector<8x16x16xf32> to vector<8x16xf32>
    %79 = vector.shape_cast %78 : vector<8x16xf32> to vector<8x16x1xf32>
    %80 = vector.broadcast %79 : vector<8x16x1xf32> to vector<8x16x16xf32>
    %81 = arith.subf %77, %80 : vector<8x16x16xf32>
    %82 = math.exp %81 : vector<8x16x16xf32>
    %cst_24 = arith.constant dense<0.000000e+00> : vector<8x16xf32>
    %83 = vector.multi_reduction <add>, %82, %cst_24 [2] : vector<8x16x16xf32> to vector<8x16xf32>
    %84 = vector.shape_cast %83 : vector<8x16xf32> to vector<8x16x1xf32>
    %85 = tpu.reciprocal %84 {approx = true} : vector<8x16x1xf32> -> vector<8x16x1xf32>
    %86 = vector.broadcast %85 : vector<8x16x1xf32> to vector<8x16x16xf32>
    %87 = arith.mulf %82, %86 : vector<8x16x16xf32>
    %88 = arith.truncf %87 : vector<8x16x16xf32> to vector<8x16x16xbf16>
    %89 = vector.extract_strided_slice %88 {offsets = [0, 0, 0], sizes = [1, 16, 16], strides = [1, 1, 1]} : vector<8x16x16xbf16> to vector<1x16x16xbf16>
    %90 = vector.shape_cast %89 : vector<1x16x16xbf16> to vector<16x16xbf16>
    %91 = vector.extract_strided_slice %40 {offsets = [0, 0], sizes = [16, 4], strides = [1, 1]} : vector<16x32xbf16> to vector<16x4xbf16>
    %cst_25 = arith.constant dense<0.000000e+00> : vector<16x4xf32>
    %92 = tpu.matmul %90, %91, %cst_25 {dimension_numbers = #tpu.dot_dimension_numbers<[1], [0], [0], [1], [0, 0, 1, 1], [], []>} : vector<16x16xbf16>, vector<16x4xbf16>, vector<16x4xf32> -> vector<16x4xf32>
    %93 = vector.extract_strided_slice %88 {offsets = [1, 0, 0], sizes = [1, 16, 16], strides = [1, 1, 1]} : vector<8x16x16xbf16> to vector<1x16x16xbf16>
    %94 = vector.shape_cast %93 : vector<1x16x16xbf16> to vector<16x16xbf16>
    %95 = vector.extract_strided_slice %40 {offsets = [0, 4], sizes = [16, 4], strides = [1, 1]} : vector<16x32xbf16> to vector<16x4xbf16>
    %cst_26 = arith.constant dense<0.000000e+00> : vector<16x4xf32>
    %96 = tpu.matmul %94, %95, %cst_26 {dimension_numbers = #tpu.dot_dimension_numbers<[1], [0], [0], [1], [0, 0, 1, 1], [], []>} : vector<16x16xbf16>, vector<16x4xbf16>, vector<16x4xf32> -> vector<16x4xf32>
    %97 = vector.extract_strided_slice %88 {offsets = [2, 0, 0], sizes = [1, 16, 16], strides = [1, 1, 1]} : vector<8x16x16xbf16> to vector<1x16x16xbf16>
    %98 = vector.shape_cast %97 : vector<1x16x16xbf16> to vector<16x16xbf16>
    %99 = vector.extract_strided_slice %40 {offsets = [0, 8], sizes = [16, 4], strides = [1, 1]} : vector<16x32xbf16> to vector<16x4xbf16>
    %cst_27 = arith.constant dense<0.000000e+00> : vector<16x4xf32>
    %100 = tpu.matmul %98, %99, %cst_27 {dimension_numbers = #tpu.dot_dimension_numbers<[1], [0], [0], [1], [0, 0, 1, 1], [], []>} : vector<16x16xbf16>, vector<16x4xbf16>, vector<16x4xf32> -> vector<16x4xf32>
    %101 = vector.extract_strided_slice %88 {offsets = [3, 0, 0], sizes = [1, 16, 16], strides = [1, 1, 1]} : vector<8x16x16xbf16> to vector<1x16x16xbf16>
    %102 = vector.shape_cast %101 : vector<1x16x16xbf16> to vector<16x16xbf16>
    %103 = vector.extract_strided_slice %40 {offsets = [0, 12], sizes = [16, 4], strides = [1, 1]} : vector<16x32xbf16> to vector<16x4xbf16>
    %cst_28 = arith.constant dense<0.000000e+00> : vector<16x4xf32>
    %104 = tpu.matmul %102, %103, %cst_28 {dimension_numbers = #tpu.dot_dimension_numbers<[1], [0], [0], [1], [0, 0, 1, 1], [], []>} : vector<16x16xbf16>, vector<16x4xbf16>, vector<16x4xf32> -> vector<16x4xf32>
    %105 = vector.extract_strided_slice %88 {offsets = [4, 0, 0], sizes = [1, 16, 16], strides = [1, 1, 1]} : vector<8x16x16xbf16> to vector<1x16x16xbf16>
    %106 = vector.shape_cast %105 : vector<1x16x16xbf16> to vector<16x16xbf16>
    %107 = vector.extract_strided_slice %40 {offsets = [0, 16], sizes = [16, 4], strides = [1, 1]} : vector<16x32xbf16> to vector<16x4xbf16>
    %cst_29 = arith.constant dense<0.000000e+00> : vector<16x4xf32>
    %108 = tpu.matmul %106, %107, %cst_29 {dimension_numbers = #tpu.dot_dimension_numbers<[1], [0], [0], [1], [0, 0, 1, 1], [], []>} : vector<16x16xbf16>, vector<16x4xbf16>, vector<16x4xf32> -> vector<16x4xf32>
    %109 = vector.extract_strided_slice %88 {offsets = [5, 0, 0], sizes = [1, 16, 16], strides = [1, 1, 1]} : vector<8x16x16xbf16> to vector<1x16x16xbf16>
    %110 = vector.shape_cast %109 : vector<1x16x16xbf16> to vector<16x16xbf16>
    %111 = vector.extract_strided_slice %40 {offsets = [0, 20], sizes = [16, 4], strides = [1, 1]} : vector<16x32xbf16> to vector<16x4xbf16>
    %cst_30 = arith.constant dense<0.000000e+00> : vector<16x4xf32>
    %112 = tpu.matmul %110, %111, %cst_30 {dimension_numbers = #tpu.dot_dimension_numbers<[1], [0], [0], [1], [0, 0, 1, 1], [], []>} : vector<16x16xbf16>, vector<16x4xbf16>, vector<16x4xf32> -> vector<16x4xf32>
    %113 = vector.extract_strided_slice %88 {offsets = [6, 0, 0], sizes = [1, 16, 16], strides = [1, 1, 1]} : vector<8x16x16xbf16> to vector<1x16x16xbf16>
    %114 = vector.shape_cast %113 : vector<1x16x16xbf16> to vector<16x16xbf16>
    %115 = vector.extract_strided_slice %40 {offsets = [0, 24], sizes = [16, 4], strides = [1, 1]} : vector<16x32xbf16> to vector<16x4xbf16>
    %cst_31 = arith.constant dense<0.000000e+00> : vector<16x4xf32>
    %116 = tpu.matmul %114, %115, %cst_31 {dimension_numbers = #tpu.dot_dimension_numbers<[1], [0], [0], [1], [0, 0, 1, 1], [], []>} : vector<16x16xbf16>, vector<16x4xbf16>, vector<16x4xf32> -> vector<16x4xf32>
    %117 = vector.extract_strided_slice %88 {offsets = [7, 0, 0], sizes = [1, 16, 16], strides = [1, 1, 1]} : vector<8x16x16xbf16> to vector<1x16x16xbf16>
    %118 = vector.shape_cast %117 : vector<1x16x16xbf16> to vector<16x16xbf16>
    %119 = vector.extract_strided_slice %40 {offsets = [0, 28], sizes = [16, 4], strides = [1, 1]} : vector<16x32xbf16> to vector<16x4xbf16>
    %cst_32 = arith.constant dense<0.000000e+00> : vector<16x4xf32>
    %120 = tpu.matmul %118, %119, %cst_32 {dimension_numbers = #tpu.dot_dimension_numbers<[1], [0], [0], [1], [0, 0, 1, 1], [], []>} : vector<16x16xbf16>, vector<16x4xbf16>, vector<16x4xf32> -> vector<16x4xf32>
    %121 = tpu.concatenate %92, %96, %100, %104, %108, %112, %116, %120 in 1 : vector<16x4xf32>, vector<16x4xf32>, vector<16x4xf32>, vector<16x4xf32>, vector<16x4xf32>, vector<16x4xf32>, vector<16x4xf32>, vector<16x4xf32> -> vector<16x32xf32>
    %122 = arith.truncf %121 : vector<16x32xf32> to vector<16x32xbf16>
    %c0_33 = arith.constant 0 : index
    %c0_34 = arith.constant 0 : index
    %123 = vector.load %arg4[%c0_33, %c0_34] : memref<32x32xbf16, #tpu.memory_space<vmem>>, vector<32x32xbf16>
    %cst_35 = arith.constant dense<0.000000e+00> : vector<16x32xf32>
    %124 = tpu.matmul %122, %123, %cst_35 {dimension_numbers = #tpu.dot_dimension_numbers<[1], [0], [0], [1], [0, 0, 1, 1], [], []>} : vector<16x32xbf16>, vector<32x32xbf16>, vector<16x32xf32> -> vector<16x32xf32>
    %125 = vector.broadcast %5 : vector<1x32xf32> to vector<16x32xf32>
    %126 = arith.addf %124, %125 : vector<16x32xf32>
    %127 = vector.broadcast %6 : vector<1x32xf32> to vector<16x32xf32>
    %128 = arith.mulf %127, %126 : vector<16x32xf32>
    %129 = arith.addf %1, %128 : vector<16x32xf32>
    %cst_36 = arith.constant dense<0.000000e+00> : vector<16xf32>
    %130 = vector.multi_reduction <add>, %129, %cst_36 [1] : vector<16x32xf32> to vector<16xf32>
    %131 = vector.shape_cast %130 : vector<16xf32> to vector<16x1xf32>
    %cst_37 = arith.constant 3.200000e+01 : f32
    %132 = vector.broadcast %cst_37 : f32 to vector<16x1xf32>
    %133 = arith.divf %131, %132 : vector<16x1xf32>
    %134 = vector.broadcast %133 : vector<16x1xf32> to vector<16x32xf32>
    %135 = arith.subf %129, %134 : vector<16x32xf32>
    %136 = arith.mulf %135, %135 : vector<16x32xf32>
    %cst_38 = arith.constant dense<0.000000e+00> : vector<16xf32>
    %137 = vector.multi_reduction <add>, %136, %cst_38 [1] : vector<16x32xf32> to vector<16xf32>
    %138 = vector.shape_cast %137 : vector<16xf32> to vector<16x1xf32>
    %cst_39 = arith.constant 3.200000e+01 : f32
    %139 = vector.broadcast %cst_39 : f32 to vector<16x1xf32>
    %140 = arith.divf %138, %139 : vector<16x1xf32>
    %141 = vector.broadcast %133 : vector<16x1xf32> to vector<16x32xf32>
    %142 = arith.subf %129, %141 : vector<16x32xf32>
    %cst_40 = arith.constant 9.99999974E-6 : f32
    %143 = vector.broadcast %cst_40 : f32 to vector<16x1xf32>
    %144 = arith.addf %140, %143 : vector<16x1xf32>
    %145 = math.rsqrt %144 : vector<16x1xf32>
    %146 = vector.broadcast %145 : vector<16x1xf32> to vector<16x32xf32>
    %147 = arith.mulf %142, %146 : vector<16x32xf32>
    %148 = vector.broadcast %7 : vector<1x32xf32> to vector<16x32xf32>
    %149 = arith.mulf %147, %148 : vector<16x32xf32>
    %150 = vector.broadcast %8 : vector<1x32xf32> to vector<16x32xf32>
    %151 = arith.addf %149, %150 : vector<16x32xf32>
    %152 = arith.truncf %151 : vector<16x32xf32> to vector<16x32xbf16>
    %c0_41 = arith.constant 0 : index
    %c0_42 = arith.constant 0 : index
    %153 = vector.load %arg5[%c0_41, %c0_42] : memref<32x128xbf16, #tpu.memory_space<vmem>>, vector<32x128xbf16>
    %cst_43 = arith.constant dense<0.000000e+00> : vector<16x128xf32>
    %154 = tpu.matmul %152, %153, %cst_43 {dimension_numbers = #tpu.dot_dimension_numbers<[1], [0], [0], [1], [0, 0, 1, 1], [], []>} : vector<16x32xbf16>, vector<32x128xbf16>, vector<16x128xf32> -> vector<16x128xf32>
    %155 = vector.broadcast %11 : vector<1x128xf32> to vector<16x128xf32>
    %156 = arith.addf %154, %155 : vector<16x128xf32>
    %cst_44 = arith.constant 5.000000e-01 : f32
    %157 = vector.broadcast %cst_44 : f32 to vector<16x128xf32>
    %158 = arith.mulf %157, %156 : vector<16x128xf32>
    %cst_45 = arith.constant 4.471500e-02 : f32
    %159 = vector.broadcast %cst_45 : f32 to vector<16x128xf32>
    %160 = arith.mulf %159, %156 : vector<16x128xf32>
    %161 = arith.mulf %160, %156 : vector<16x128xf32>
    %162 = arith.mulf %161, %156 : vector<16x128xf32>
    %163 = arith.addf %156, %162 : vector<16x128xf32>
    %cst_46 = arith.constant 0.797884583 : f32
    %164 = vector.broadcast %cst_46 : f32 to vector<16x128xf32>
    %165 = arith.mulf %164, %163 : vector<16x128xf32>
    %166 = math.tanh %165 : vector<16x128xf32>
    %cst_47 = arith.constant 1.000000e+00 : f32
    %167 = vector.broadcast %cst_47 : f32 to vector<16x128xf32>
    %168 = arith.addf %167, %166 : vector<16x128xf32>
    %169 = arith.mulf %158, %168 : vector<16x128xf32>
    %170 = arith.truncf %169 : vector<16x128xf32> to vector<16x128xbf16>
    %c0_48 = arith.constant 0 : index
    %c0_49 = arith.constant 0 : index
    %171 = vector.load %arg6[%c0_48, %c0_49] : memref<128x32xbf16, #tpu.memory_space<vmem>>, vector<128x32xbf16>
    %cst_50 = arith.constant dense<0.000000e+00> : vector<16x32xf32>
    %172 = tpu.matmul %170, %171, %cst_50 {dimension_numbers = #tpu.dot_dimension_numbers<[1], [0], [0], [1], [0, 0, 1, 1], [], []>} : vector<16x128xbf16>, vector<128x32xbf16>, vector<16x32xf32> -> vector<16x32xf32>
    %173 = vector.broadcast %9 : vector<1x32xf32> to vector<16x32xf32>
    %174 = arith.addf %172, %173 : vector<16x32xf32>
    %175 = vector.broadcast %10 : vector<1x32xf32> to vector<16x32xf32>
    %176 = arith.mulf %175, %174 : vector<16x32xf32>
    %177 = arith.addf %129, %176 : vector<16x32xf32>
    %c0_51 = arith.constant 0 : index
    %c0_52 = arith.constant 0 : index
    %c0_53 = arith.constant 0 : index
    %178 = vector.load %arg9[%c0_51, %c0_52, %c0_53] : memref<1x16x32xf32, #tpu.memory_space<vmem>>, vector<1x16x32xf32>
    %179 = vector.shape_cast %178 : vector<1x16x32xf32> to vector<16x32xf32>
    %180 = vector.shape_cast %177 : vector<16x32xf32> to vector<1x16x32xf32>
    tpu.vector_store %arg9[%c0_51, %c0_52, %c0_53], %180 {strides = array<i32>} : memref<1x16x32xf32, #tpu.memory_space<vmem>>, vector<1x16x32xf32>,
    return
  }
  func.func @transform_0(%arg0: i32) -> (i32, i32, i32) {
    %c0_i32 = arith.constant 0 : i32
    %c0_i32_0 = arith.constant 0 : i32
    %c0_i32_1 = arith.constant 0 : i32
    return %arg0, %c0_i32, %c0_i32_0 : i32, i32, i32
  }
  func.func @transform_1(%arg0: i32) -> (i32, i32) {
    %c0_i32 = arith.constant 0 : i32
    %c0_i32_0 = arith.constant 0 : i32
    %c0_i32_1 = arith.constant 0 : i32
    return %c0_i32, %c0_i32_0 : i32, i32
  }
  func.func @transform_2(%arg0: i32) -> (i32, i32) {
    %c0_i32 = arith.constant 0 : i32
    %c0_i32_0 = arith.constant 0 : i32
    %c0_i32_1 = arith.constant 0 : i32
    return %c0_i32, %c0_i32_0 : i32, i32
  }
  func.func @transform_3(%arg0: i32) -> (i32, i32) {
    %c0_i32 = arith.constant 0 : i32
    %c0_i32_0 = arith.constant 0 : i32
    %c0_i32_1 = arith.constant 0 : i32
    return %c0_i32, %c0_i32_0 : i32, i32
  }
  func.func @transform_4(%arg0: i32) -> (i32, i32) {
    %c0_i32 = arith.constant 0 : i32
    %c0_i32_0 = arith.constant 0 : i32
    %c0_i32_1 = arith.constant 0 : i32
    return %c0_i32, %c0_i32_0 : i32, i32
  }
  func.func @transform_5(%arg0: i32) -> (i32, i32) {
    %c0_i32 = arith.constant 0 : i32
    %c0_i32_0 = arith.constant 0 : i32
    %c0_i32_1 = arith.constant 0 : i32
    return %c0_i32, %c0_i32_0 : i32, i32
  }
  func.func @transform_6(%arg0: i32) -> (i32, i32) {
    %c0_i32 = arith.constant 0 : i32
    %c0_i32_0 = arith.constant 0 : i32
    %c0_i32_1 = arith.constant 0 : i32
    return %c0_i32, %c0_i32_0 : i32, i32
  }
  func.func @transform_7(%arg0: i32) -> (i32, i32) {
    %c0_i32 = arith.constant 0 : i32
    %c0_i32_0 = arith.constant 0 : i32
    %c0_i32_1 = arith.constant 0 : i32
    return %c0_i32, %c0_i32_0 : i32, i32
  }
  func.func @transform_8(%arg0: i32) -> (i32, i32, i32) {
    %c0_i32 = arith.constant 0 : i32
    %c0_i32_0 = arith.constant 0 : i32
    %c0_i32_1 = arith.constant 0 : i32
    return %arg0, %c0_i32, %c0_i32_0 : i32, i32, i32
  }
}

</mosaic_0001>

<llo_original>
// kernel: tpu_custom_call.1
$region0: #{tpu_custom_call.1}
  #allocation0 [shape = 'u32[]', space=smem, size = 0x4, offset = 0x4, fixed_abs, tag = 'smem constant byte address 0x4 - core index']
  #allocation1 [shape = 'u32[144,128]{1,0:T(1,128)}', space=vmem, size = 0x12000, scoped, tag = 'internal scratch']
  %s0 = inlined_call_operand.vmem [shape: f32[4,16,32], index: 0, kind: input, shape index: {}]
  %s1 = inlined_call_operand.vmem [shape: f32[16,16], index: 1, kind: input, shape index: {}]
  %s2 = inlined_call_operand.hbm [shape: bf16[32,96], index: 2, kind: input, shape index: {}]
  %s3 = inlined_call_operand.hbm [shape: bf16[32,32], index: 3, kind: input, shape index: {}]
  %s4 = inlined_call_operand.hbm [shape: bf16[32,128], index: 4, kind: input, shape index: {}]
  %s5 = inlined_call_operand.vmem [shape: bf16[128,32], index: 5, kind: input, shape index: {}]
  %s6 = inlined_call_operand.hbm [shape: f32[8,32], index: 6, kind: input, shape index: {}]
  %s7 = inlined_call_operand.vmem [shape: f32[1,128], index: 7, kind: input, shape index: {}]
  %s8 = inlined_call_operand.hbm [shape: f32[4,16,32], index: 8, kind: output, shape index: {}]
  %s9 = sld [smem:[#allocation0]]
  $region81: #{tpu_custom_call.1} parent=0
    _
  %s11 = ssub.s32 1, %s9
  %s12 = scalar_select 0, %s11, %s9
  $region1: #{tpu_custom_call.1} parent=0
    #allocation2 [shape = 'u8[8192]{0}', space=vmem, size = 0x2000, scoped, tag = 'input window, operand 2, single buffered']
    #allocation3 [shape = 's32[2]{0}', space=sflag, size = 0x8, scoped, tag = 'scoped memory for tpu_custom_call.1']
    #allocation4 [shape = 's32[2]{0}', space=sflag, size = 0x8, scoped, tag = 'scoped memory for tpu_custom_call.1']
    #allocation5 [shape = 'u8[8192]{0}', space=vmem, size = 0x2000, scoped, tag = 'input window, operand 3, single buffered']
    #allocation6 [shape = 's32[1]{0}', space=sflag, size = 0x4, scoped, tag = 'scoped memory for tpu_custom_call.1']
    #allocation7 [shape = 'u8[8192]{0}', space=vmem, size = 0x2000, scoped, tag = 'input window, operand 4, single buffered']
    #allocation8 [shape = 'u8[4096]{0}', space=vmem, size = 0x1000, scoped, tag = 'input window, operand 6, single buffered']
    #allocation9 [shape = 's32[1]{0}', space=sflag, size = 0x4, scoped, tag = 'scoped memory for tpu_custom_call.1']
    #allocation10 [shape = 'u8[16384]{0}', space=vmem, size = 0x4000, scoped, tag = 'output window, operand 0']
    %13 = vsyncpa [#allocation3], 0
    %14 = vsyncpa [#allocation6], 0
    %15 = vsyncpa [#allocation9], 0
    %16 = vsyncpa [#allocation4], 0
    %s17 = scalar_lea.sflag [#allocation4], 1
    %18 = vsyncpa %s17, 0
    loop: start=0, step=1, limit=6
    $region2: #{tpu_custom_call.1} parent=1 // loop_pre_header
      _
    $region3: #{tpu_custom_call.1} parent=1 // loop_header
      %s20 = sphi 0, %s24
      %p21 = scmp.ge.s32.totalorder %s20, 6
      %s30 = sphi 0, %s32
      %s33 = sphi 0, %s30
      %s34 = sphi 0, %s33
      %s50 = sphi 0, %s34
      %s54 = sphi 0, %s54
      %s56 = sphi 0, %s54
      %s57 = sphi 0, %s56
      %s71 = sphi 0, %s57
      %s75 = sphi 0, %s75
      %s77 = sphi 0, %s75
      %s78 = sphi 0, %s77
      %s92 = sphi 0, %s78
      %s96 = sphi 0, %s96
      %s98 = sphi 0, %s96
      %s99 = sphi 0, %s98
      %s113 = sphi 0, %s99
      %s117 = sphi 0, %s117
      %s119 = sphi 0, %s117
      %s120 = sphi 0, %s119
      %s134 = sphi 0, %s120
      %s138 = sphi 0, %s138
      %s140 = sphi 0, %s138
      %s141 = sphi 0, %s140
      %s155 = sphi 0, %s141
      %s159 = sphi 0, %s159
      %s161 = sphi 0, %s159
      %s162 = sphi 0, %s161
      %s176 = sphi 0, %s162
      %s180 = sphi 0, %s180
      %s182 = sphi 0, %s180
      %s183 = sphi 0, %s182
      %s197 = sphi 0, %s183
      %s203 = sphi 0, %s205
      %s206 = sphi 0, %s203
      %s207 = sphi 0, %s206
      %s223 = sphi 0, %s207
    $region4: #{tpu_custom_call.1} parent=1 // loop_header_branch
      %23 = sbr.rel (%p21) target = $region8
    $region5: #{tpu_custom_call.1} parent=1 // loop_body
      %s25 = ssub.s32 %s20, 1
      %s26 = ssub.s32 %s20, 2
      %s27 = sadd.s32 %s20, 1
      %s28 = ssub.s32 %s20, %s27
      %p29 = scmp.eq.s32.totalorder %s28, 0
      %s31 = sadd.s32 %s30, 1
      %s32 = scalar_select %p29, %s30, %s31
      %p35 = pneg %p29
      %p36 = scmp.eq.s32.totalorder %s20, 3
      %p37 = por %p35, %p36
      %p38 = scmp.ne.s32.totalorder %s30, %s33
      %p39 = scmp.eq.s32.totalorder %s20, 0
      %p40 = por %p38, %p39
      %p41 = scmp.ne.s32.totalorder %s30, %s33
      %p42 = scmp.eq.s32.totalorder %s25, 3
      %p43 = por %p41, %p42
      %p44 = scmp.ne.s32.totalorder %s33, %s34
      %p45 = scmp.eq.s32.totalorder %s25, 0
      %p46 = por %p44, %p45
      %p47 = scmp.ne.s32.totalorder %s33, %s34
      %p48 = scmp.eq.s32.totalorder %s26, 3
      %p49 = por %p47, %p48
      %p51 = scmp.ne.s32.totalorder %s34, %s50
      %p52 = scmp.eq.s32.totalorder %s26, 0
      %p53 = por %p51, %p52
      %s55 = sadd.s32 %s54, 1
      %p58 = scmp.eq.s32.totalorder %s20, 3
      %p59 = scmp.ne.s32.totalorder %s54, %s56
      %p60 = scmp.eq.s32.totalorder %s20, 0
      %p61 = por %p59, %p60
      %p62 = scmp.ne.s32.totalorder %s54, %s56
      %p63 = scmp.eq.s32.totalorder %s25, 3
      %p64 = por %p62, %p63
      %p65 = scmp.ne.s32.totalorder %s56, %s57
      %p66 = scmp.eq.s32.totalorder %s25, 0
      %p67 = por %p65, %p66
      %p68 = scmp.ne.s32.totalorder %s56, %s57
      %p69 = scmp.eq.s32.totalorder %s26, 3
      %p70 = por %p68, %p69
      %p72 = scmp.ne.s32.totalorder %s57, %s71
      %p73 = scmp.eq.s32.totalorder %s26, 0
      %p74 = por %p72, %p73
      %s76 = sadd.s32 %s75, 1
      %p79 = scmp.eq.s32.totalorder %s20, 3
      %p80 = scmp.ne.s32.totalorder %s75, %s77
      %p81 = scmp.eq.s32.totalorder %s20, 0
      %p82 = por %p80, %p81
      %p83 = scmp.ne.s32.totalorder %s75, %s77
      %p84 = scmp.eq.s32.totalorder %s25, 3
      %p85 = por %p83, %p84
      %p86 = scmp.ne.s32.totalorder %s77, %s78
      %p87 = scmp.eq.s32.totalorder %s25, 0
      %p88 = por %p86, %p87
      %p89 = scmp.ne.s32.totalorder %s77, %s78
      %p90 = scmp.eq.s32.totalorder %s26, 3
      %p91 = por %p89, %p90
      %p93 = scmp.ne.s32.totalorder %s78, %s92
      %p94 = scmp.eq.s32.totalorder %s26, 0
      %p95 = por %p93, %p94
      %s97 = sadd.s32 %s96, 1
      %p100 = scmp.eq.s32.totalorder %s20, 3
      %p101 = scmp.ne.s32.totalorder %s96, %s98
      %p102 = scmp.eq.s32.totalorder %s20, 0
      %p103 = por %p101, %p102
      %p104 = scmp.ne.s32.totalorder %s96, %s98
      %p105 = scmp.eq.s32.totalorder %s25, 3
      %p106 = por %p104, %p105
      %p107 = scmp.ne.s32.totalorder %s98, %s99
      %p108 = scmp.eq.s32.totalorder %s25, 0
      %p109 = por %p107, %p108
      %p110 = scmp.ne.s32.totalorder %s98, %s99
      %p111 = scmp.eq.s32.totalorder %s26, 3
      %p112 = por %p110, %p111
      %p114 = scmp.ne.s32.totalorder %s99, %s113
      %p115 = scmp.eq.s32.totalorder %s26, 0
      %p116 = por %p114, %p115
      %s118 = sadd.s32 %s117, 1
      %p121 = scmp.eq.s32.totalorder %s20, 3
      %p122 = scmp.ne.s32.totalorder %s117, %s119
      %p123 = scmp.eq.s32.totalorder %s20, 0
      %p124 = por %p122, %p123
      %p125 = scmp.ne.s32.totalorder %s117, %s119
      %p126 = scmp.eq.s32.totalorder %s25, 3
      %p127 = por %p125, %p126
      %p128 = scmp.ne.s32.totalorder %s119, %s120
      %p129 = scmp.eq.s32.totalorder %s25, 0
      %p130 = por %p128, %p129
      %p131 = scmp.ne.s32.totalorder %s119, %s120
      %p132 = scmp.eq.s32.totalorder %s26, 3
      %p133 = por %p131, %p132
      %p135 = scmp.ne.s32.totalorder %s120, %s134
      %p136 = scmp.eq.s32.totalorder %s26, 0
      %p137 = por %p135, %p136
      %s139 = sadd.s32 %s138, 1
      %p142 = scmp.eq.s32.totalorder %s20, 3
      %p143 = scmp.ne.s32.totalorder %s138, %s140
      %p144 = scmp.eq.s32.totalorder %s20, 0
      %p145 = por %p143, %p144
      %p146 = scmp.ne.s32.totalorder %s138, %s140
      %p147 = scmp.eq.s32.totalorder %s25, 3
      %p148 = por %p146, %p147
      %p149 = scmp.ne.s32.totalorder %s140, %s141
      %p150 = scmp.eq.s32.totalorder %s25, 0
      %p151 = por %p149, %p150
      %p152 = scmp.ne.s32.totalorder %s140, %s141
      %p153 = scmp.eq.s32.totalorder %s26, 3
      %p154 = por %p152, %p153
      %p156 = scmp.ne.s32.totalorder %s141, %s155
      %p157 = scmp.eq.s32.totalorder %s26, 0
      %p158 = por %p156, %p157
      %s160 = sadd.s32 %s159, 1
      %p163 = scmp.eq.s32.totalorder %s20, 3
      %p164 = scmp.ne.s32.totalorder %s159, %s161
      %p165 = scmp.eq.s32.totalorder %s20, 0
      %p166 = por %p164, %p165
      %p167 = scmp.ne.s32.totalorder %s159, %s161
      %p168 = scmp.eq.s32.totalorder %s25, 3
      %p169 = por %p167, %p168
      %p170 = scmp.ne.s32.totalorder %s161, %s162
      %p171 = scmp.eq.s32.totalorder %s25, 0
      %p172 = por %p170, %p171
      %p173 = scmp.ne.s32.totalorder %s161, %s162
      %p174 = scmp.eq.s32.totalorder %s26, 3
      %p175 = por %p173, %p174
      %p177 = scmp.ne.s32.totalorder %s162, %s176
      %p178 = scmp.eq.s32.totalorder %s26, 0
      %p179 = por %p177, %p178
      %s181 = sadd.s32 %s180, 1
      %p184 = scmp.eq.s32.totalorder %s20, 3
      %p185 = scmp.ne.s32.totalorder %s180, %s182
      %p186 = scmp.eq.s32.totalorder %s20, 0
      %p187 = por %p185, %p186
      %p188 = scmp.ne.s32.totalorder %s180, %s182
      %p189 = scmp.eq.s32.totalorder %s25, 3
      %p190 = por %p188, %p189
      %p191 = scmp.ne.s32.totalorder %s182, %s183
      %p192 = scmp.eq.s32.totalorder %s25, 0
      %p193 = por %p191, %p192
      %p194 = scmp.ne.s32.totalorder %s182, %s183
      %p195 = scmp.eq.s32.totalorder %s26, 3
      %p196 = por %p194, %p195
      %p198 = scmp.ne.s32.totalorder %s183, %s197
      %p199 = scmp.eq.s32.totalorder %s26, 0
      %p200 = por %p198, %p199
      %s201 = ssub.s32 %s20, %s27
      %p202 = scmp.eq.s32.totalorder %s201, 0
      %s204 = sadd.s32 %s203, 1
      %s205 = scalar_select %p202, %s203, %s204
      %p208 = pneg %p202
      %p209 = scmp.eq.s32.totalorder %s20, 3
      %p210 = por %p208, %p209
      %p211 = scmp.ne.s32.totalorder %s203, %s206
      %p212 = scmp.eq.s32.totalorder %s20, 0
      %p213 = por %p211, %p212
      %p214 = scmp.ne.s32.totalorder %s203, %s206
      %p215 = scmp.eq.s32.totalorder %s25, 3
      %p216 = por %p214, %p215
      %p217 = scmp.ne.s32.totalorder %s206, %s207
      %p218 = scmp.eq.s32.totalorder %s25, 0
      %p219 = por %p217, %p218
      %p220 = scmp.ne.s32.totalorder %s206, %s207
      %p221 = scmp.eq.s32.totalorder %s26, 3
      %p222 = por %p220, %p221
      %p224 = scmp.ne.s32.totalorder %s207, %s223
      %p225 = scmp.eq.s32.totalorder %s26, 0
      %p226 = por %p224, %p225
      %p227 = scmp.le.s32.totalorder 1, %s20
      %p228 = scmp.lt.s32.totalorder %s20, 5
      %p229 = pnand %p227, %p228
      %p230 = pneg %p229
      // Predicated region
      $region9: #{tpu_custom_call.1} parent=5 // pred_check
        _
      $region10: #{tpu_custom_call.1} parent=5 // pred_check_branch
        %232 = sbr.rel (%p229) target = $region12
      $region11: #{tpu_custom_call.1} parent=5 // pred_region
        %s233 = ssub.s32 %s20, 1
        // Predicated region
        $region13: #{tpu_custom_call.1} parent=11 // pred_check
          %p234 = pneg %p67
        $region14: #{tpu_custom_call.1} parent=11 // pred_check_branch
          %236 = sbr.rel (%p234) target = $region16
        $region15: #{tpu_custom_call.1} parent=11 // pred_region
          _
        $region16: #{tpu_custom_call.1} parent=11 // pred_fallthru
          _
        // Predicated region
        $region17: #{tpu_custom_call.1} parent=11 // pred_check
          %p237 = pneg %p88
        $region18: #{tpu_custom_call.1} parent=11 // pred_check_branch
          %239 = sbr.rel (%p237) target = $region20
        $region19: #{tpu_custom_call.1} parent=11 // pred_region
          %s241 = ssub.s32 256, 256
          %242 = vsyncadd [#allocation3], %s241
          %s243 = sshll.u32 [#allocation2], 4
          %s244 = int_to_ptr.vmem [resolvable:$true] %s243
          %249 = dma.hbm_to_vmem [thread:$0]  %s2, 256, %s244, [#allocation3], 64, 64, 4
        $region20: #{tpu_custom_call.1} parent=11 // pred_fallthru
          _
        // Predicated region
        $region21: #{tpu_custom_call.1} parent=11 // pred_check
          %p250 = pneg %p109
        $region22: #{tpu_custom_call.1} parent=11 // pred_check_branch
          %252 = sbr.rel (%p250) target = $region24
        $region23: #{tpu_custom_call.1} parent=11 // pred_region
          %s254 = ssub.s32 256, 256
          %255 = vsyncadd [#allocation6], %s254
          %s256 = sshll.u32 [#allocation5], 4
          %s257 = int_to_ptr.vmem [resolvable:$true] %s256
          %262 = dma.hbm_to_vmem [thread:$0]  %s3, 256, %s257, [#allocation6], 64, 64, 4
        $region24: #{tpu_custom_call.1} parent=11 // pred_fallthru
          _
        // Predicated region
        $region25: #{tpu_custom_call.1} parent=11 // pred_check
          %p263 = pneg %p130
        $region26: #{tpu_custom_call.1} parent=11 // pred_check_branch
          %265 = sbr.rel (%p263) target = $region28
        $region27: #{tpu_custom_call.1} parent=11 // pred_region
          %s267 = ssub.s32 256, 256
          %268 = vsyncadd [#allocation6], %s267
          %s269 = sshll.u32 [#allocation7], 4
          %s270 = int_to_ptr.vmem [resolvable:$true] %s269
          %275 = dma.hbm_to_vmem [thread:$0]  %s4, 256, %s270, [#allocation6], 64, 64, 4
        $region28: #{tpu_custom_call.1} parent=11 // pred_fallthru
          _
        // Predicated region
        $region29: #{tpu_custom_call.1} parent=11 // pred_check
          %p276 = pneg %p151
        $region30: #{tpu_custom_call.1} parent=11 // pred_check_branch
          %278 = sbr.rel (%p276) target = $region32
        $region31: #{tpu_custom_call.1} parent=11 // pred_region
          _
        $region32: #{tpu_custom_call.1} parent=11 // pred_fallthru
          _
        // Predicated region
        $region33: #{tpu_custom_call.1} parent=11 // pred_check
          %p279 = pneg %p172
        $region34: #{tpu_custom_call.1} parent=11 // pred_check_branch
          %281 = sbr.rel (%p279) target = $region36
        $region35: #{tpu_custom_call.1} parent=11 // pred_region
          %s283 = ssub.s32 128, 128
          %284 = vsyncadd [#allocation9], %s283
          %s286 = sshll.u32 [#allocation8], 4
          %s287 = int_to_ptr.vmem [resolvable:$true] %s286
          %289 = dma.hbm_to_vmem [thread:$0]  %s6, 128, %s287, [#allocation9]
        $region36: #{tpu_custom_call.1} parent=11 // pred_fallthru
          _
        // Predicated region
        $region37: #{tpu_custom_call.1} parent=11 // pred_check
          %p290 = pneg %p193
        $region38: #{tpu_custom_call.1} parent=11 // pred_check_branch
          %292 = sbr.rel (%p290) target = $region40
        $region39: #{tpu_custom_call.1} parent=11 // pred_region
          _
        $region40: #{tpu_custom_call.1} parent=11 // pred_fallthru
          _
      $region12: #{tpu_custom_call.1} parent=5 // pred_fallthru
        _
      %p293 = scmp.lt.s32.totalorder %s20, 4
      // Predicated region
      $region41: #{tpu_custom_call.1} parent=5 // pred_check
        %p294 = pneg %p293
      $region42: #{tpu_custom_call.1} parent=5 // pred_check_branch
        %296 = sbr.rel (%p294) target = $region44
      $region43: #{tpu_custom_call.1} parent=5 // pred_region
        // Predicated region
        $region45: #{tpu_custom_call.1} parent=43 // pred_check
          %p297 = pneg %p40
        $region46: #{tpu_custom_call.1} parent=43 // pred_check_branch
          %299 = sbr.rel (%p297) target = $region48
        $region47: #{tpu_custom_call.1} parent=43 // pred_region
          %p300 = scmp.lt.s32.totalorder %s20, 3
          %s301 = scalar_select %p300, %s20, 3
          %s302 = smul.addr %s301, 2
          %s303 = smul.addr %s302, 8
          %s304 = scalar_lea.vmem %s0, %s303
        $region48: #{tpu_custom_call.1} parent=43 // pred_fallthru
          _
      $region44: #{tpu_custom_call.1} parent=5 // pred_fallthru
        _
      %p305 = scmp.le.s32.totalorder 1, %s20
      %p306 = scmp.lt.s32.totalorder %s20, 5
      %p307 = pnand %p305, %p306
      %p308 = pneg %p307
      // Predicated region
      $region49: #{tpu_custom_call.1} parent=5 // pred_check
        _
      $region50: #{tpu_custom_call.1} parent=5 // pred_check_branch
        %310 = sbr.rel (%p307) target = $region52
      $region51: #{tpu_custom_call.1} parent=5 // pred_region
        %s311 = ssub.s32 %s20, 1
        // Predicated region
        $region53: #{tpu_custom_call.1} parent=51 // pred_check
          %p312 = pneg %p88
        $region54: #{tpu_custom_call.1} parent=51 // pred_check_branch
          %314 = sbr.rel (%p312) target = $region56
        $region55: #{tpu_custom_call.1} parent=51 // pred_region
          %315 = dma.done [#allocation3], 256
        $region56: #{tpu_custom_call.1} parent=51 // pred_fallthru
          _
        // Predicated region
        $region57: #{tpu_custom_call.1} parent=51 // pred_check
          %p316 = pneg %p109
        $region58: #{tpu_custom_call.1} parent=51 // pred_check_branch
          %318 = sbr.rel (%p316) target = $region60
        $region59: #{tpu_custom_call.1} parent=51 // pred_region
          %319 = dma.done [#allocation6], 256
        $region60: #{tpu_custom_call.1} parent=51 // pred_fallthru
          _
        // Predicated region
        $region61: #{tpu_custom_call.1} parent=51 // pred_check
          %p320 = pneg %p130
        $region62: #{tpu_custom_call.1} parent=51 // pred_check_branch
          %322 = sbr.rel (%p320) target = $region64
        $region63: #{tpu_custom_call.1} parent=51 // pred_region
          %323 = dma.done [#allocation6], 256
        $region64: #{tpu_custom_call.1} parent=51 // pred_fallthru
          _
        // Predicated region
        $region65: #{tpu_custom_call.1} parent=51 // pred_check
          %p324 = pneg %p172
        $region66: #{tpu_custom_call.1} parent=51 // pred_check_branch
          %326 = sbr.rel (%p324) target = $region68
        $region67: #{tpu_custom_call.1} parent=51 // pred_region
          %327 = dma.done [#allocation9], 128
        $region68: #{tpu_custom_call.1} parent=51 // pred_fallthru
          _
        %p328 = scmp.lt.s32.totalorder %s25, 3
        %s329 = scalar_select %p328, %s25, 3
        %s330 = smul.addr %s329, 2
        %s331 = smul.addr %s330, 8
        %s332 = scalar_lea.vmem %s0, %s331
        %p333 = pneg %p46
        %p334 = pneg %p43
        %p335 = pneg %p67
        %p336 = pneg %p64
        %p337 = pneg %p88
        %p338 = pneg %p85
        %p339 = pneg %p109
        %p340 = pneg %p106
        %p341 = pneg %p130
        %p342 = pneg %p127
        %p343 = pneg %p151
        %p344 = pneg %p148
        %p345 = pneg %p172
        %p346 = pneg %p169
        %p347 = pneg %p193
        %p348 = pneg %p190
        %p349 = pneg %p219
        %p350 = pneg %p216
        %s351 = sand.u32 %s206, 1
        %s352 = scalar_lea.sflag [#allocation4], %s351
        %s353 = sand.u32 %s206, 1
        %s354 = smul.addr %s353, 16
        %s355 = scalar_lea.vmem [#allocation10], %s354
        %p356 = scmp.lt.s32.totalorder %s25, 3
        %s357 = scalar_select %p356, %s25, 3
        %s358 = smul.addr %s357, 2
        %s359 = smul.addr %s358, 8
        %s360 = scalar_lea.vmem %s0, %s359
        %v362 = vld [vmem:[%s360] sm:$0xff]
        %v363 = vld [vmem:[%s360 + $0x8] sm:$0xff]
        %v364 = vld [vmem:[#allocation8] sm:$0xff]
        %v365 = vld [vmem:[%s7] sm:$0x1]
        %vm366 = vcmask 261120
        %v367 = vsel %vm366, %v362, 0.0
        %368 = vadd.xlane.f32.xlu0 %v367
        %v369 = vpop.xlane.xlu0 %368
        %v370 = vsel %vm366, %v363, 0.0
        %371 = vadd.xlane.f32.xlu0 %v370
        %v372 = vpop.xlane.xlu0 %371
        %v373 = vrcp.pop 32.0
        %v374 = vmul.f32 %v369, %v373
        %v375 = vmul.f32 %v372, %v373
        %v376 = vsub.f32 %v362, %v374
        %v377 = vsub.f32 %v363, %v375
        %v378 = vmul.f32 %v376, %v376
        %v379 = vmul.f32 %v377, %v377
        %v380 = vsel %vm366, %v378, 0.0
        %381 = vadd.xlane.f32.xlu0 %v380
        %v382 = vpop.xlane.xlu0 %381
        %v383 = vsel %vm366, %v379, 0.0
        %384 = vadd.xlane.f32.xlu0 %v383
        %v385 = vpop.xlane.xlu0 %384
        %v386 = vmul.f32 %v382, %v373
        %v387 = vmul.f32 %v385, %v373
        %v388 = vadd.f32 %v386, 1e-05
        %v389 = vadd.f32 %v387, 1e-05
        %v390 = vrsqrt.pop %v388
        %v391 = vrsqrt.pop %v389
        %v392 = vmul.f32 %v376, %v390
        %v393 = vmul.f32 %v377, %v391
        %v394 = vlaneseq
        %v395 = vshrl.u32 %v394, 7
        %v396 = vsub.s32 0, %v395
        %v397 = vrot.slane %v364, %v396
        %v398 = vmul.f32 %v392, %v397
        %v399 = vmul.f32 %v393, %v397
        %v400 = vlaneseq
        %v401 = vshrl.u32 %v400, 7
        %v402 = vsub.s32 1, %v401
        %v403 = vrot.slane %v364, %v402
        %v404 = vadd.f32 %v398, %v403
        %v405 = vadd.f32 %v399, %v403
        %v406 = vpack.c.bf16 %v405, %v404
        %v407 = vld [vmem:[#allocation2] sm:$0xf]
        %v408 = vld [vmem:[#allocation2 + $0x4] sm:$0xf]
        %v409 = vld [vmem:[#allocation2 + $0x8] sm:$0xf]
        %v410 = vld [vmem:[#allocation2 + $0xc] sm:$0xf]
        %v415 = vunpack.c.l.b16 %v407
        %v416 = vunpack.c.l.b16 %v408
        %v417 = vunpack.c.l.b16 %v409
        %v418 = vunpack.c.l.b16 %v410
        %v419 = vpack.c.b16 %v416, %v415
        %v420 = vpack.c.b16 %v418, %v417
        %v424 = vsel %vm366, %v406, 0
        %426 = vmatprep.subr.bf16.mxu0 0
        %427 = vmatpush1.bf16.msra.mxu0 %v419
        %428 = vmatprep.subr.bf16.mxu0 0
        %429 = vmatpush1.bf16.msra.mxu0 %v420
        %430 = vmatprep.subr.bf16.mxu0 0
        %431 = vmatpush1.bf16.msra.mxu0 0
        %432 = vmatprep.subr.bf16.mxu0 0
        %433 = vmatpush1.bf16.msra.mxu0 0
        %434 = vmatprep.subr.bf16.mxu0 0
        %435 = vmatpush1.bf16.msra.mxu0 0
        %436 = vmatprep.subr.bf16.mxu0 0
        %437 = vmatpush1.bf16.msra.mxu0 0
        %438 = vmatprep.subr.bf16.mxu0 0
        %439 = vmatpush1.bf16.msra.mxu0 0
        %440 = vmatprep.subr.bf16.mxu0 0
        %441 = vmatpush1.bf16.msra.mxu0 0
        %442 = vmatprep.subr.bf16.mxu0 0
        %443 = vmatpush1.bf16.msra.mxu0 0
        %444 = vmatprep.subr.bf16.mxu0 0
        %445 = vmatpush1.bf16.msra.mxu0 0
        %446 = vmatprep.subr.bf16.mxu0 0
        %447 = vmatpush1.bf16.msra.mxu0 0
        %448 = vmatprep.subr.bf16.mxu0 0
        %449 = vmatpush1.bf16.msra.mxu0 0
        %450 = vmatprep.subr.bf16.mxu0 0
        %451 = vmatpush1.bf16.msra.mxu0 0
        %452 = vmatprep.subr.bf16.mxu0 0
        %453 = vmatpush1.bf16.msra.mxu0 0
        %454 = vmatprep.subr.bf16.mxu0 0
        %455 = vmatpush1.bf16.msra.mxu0 0
        %456 = vmatprep.subr.bf16.mxu0 0
        %457 = vmatpush1.bf16.msra.mxu0 0
        %458 = vmatprep.mubr.bf16.mxu0 0
        %459 = vmatmul.mubr.bf16.gmra.mrb[0].mxu0 %v424
        %v460 = vpop.f32.mrb[0].mxu0
        %v461 = vadd.f32 0.0, %v460
        %v462 = vpop.f32.mrb[0].mxu0
        %v463 = vpop.f32.mrb[0].mxu0
        %v464 = vadd.f32 0.0, %v463
        %v465 = vpop.f32.mrb[0].mxu0
        %466 = vdwg.mxu0
        %v467 = vpack.c.bf16 %v464, %v461
        %470 = vrot.lane.b32.xlu0 %v461, 96
        %v471 = vpop.permute.xlu0 %470
        %472 = vrot.lane.b32.xlu0 %v464, 96
        %v473 = vpop.permute.xlu0 %472
        %vm474 = vcmask 31744
        %v475 = vsel %vm474, %v461, 0
        %v477 = vsel %vm474, %v464, 0
        %v479 = vsel %vm474, %v471, 0
        %v481 = vsel %vm474, %v473, 0
        %483 = vmatprep.subr.mxu0 0.0
        %484 = vmatpush1.xpose.msra.mxu0 %v479
        %485 = vmatprep.subr.mxu0 0.0
        %486 = vmatpush1.xpose.msra.mxu0 %v481
        %487 = vmatprep.subr.mxu0 0.0
        %488 = vmatpush1.xpose.msra.mxu0 0.0
        %489 = vmatprep.subr.mxu0 0.0
        %490 = vmatpush1.xpose.msra.mxu0 0.0
        %491 = vmatprep.subr.mxu0 0.0
        %492 = vmatpush1.xpose.msra.mxu0 0.0
        %493 = vmatprep.subr.mxu0 0.0
        %494 = vmatpush1.xpose.msra.mxu0 0.0
        %495 = vmatprep.subr.mxu0 0.0
        %496 = vmatpush1.xpose.msra.mxu0 0.0
        %497 = vmatprep.subr.mxu0 0.0
        %498 = vmatpush1.xpose.msra.mxu0 0.0
        %499 = vmatprep.subr.mxu0 0.0
        %500 = vmatpush1.xpose.msra.mxu0 0.0
        %501 = vmatprep.subr.mxu0 0.0
        %502 = vmatpush1.xpose.msra.mxu0 0.0
        %503 = vmatprep.subr.mxu0 0.0
        %504 = vmatpush1.xpose.msra.mxu0 0.0
        %505 = vmatprep.subr.mxu0 0.0
        %506 = vmatpush1.xpose.msra.mxu0 0.0
        %507 = vmatprep.subr.mxu0 0.0
        %508 = vmatpush1.xpose.msra.mxu0 0.0
        %509 = vmatprep.subr.mxu0 0.0
        %510 = vmatpush1.xpose.msra.mxu0 0.0
        %511 = vmatprep.subr.mxu0 0.0
        %512 = vmatpush1.xpose.msra.mxu0 0.0
        %513 = vmatprep.subr.mxu0 0.0
        %514 = vmatpush1.xpose.msra.mxu0 0.0
        %515 = vmatprep.subr.mxu0 0.0
        %516 = vmatpush1.xpose.msra.mxu0 0.0
        %517 = vmatprep.subr.mxu0 0.0
        %518 = vmatpush1.xpose.msra.mxu0 0.0
        %519 = vmatprep.subr.mxu0 0.0
        %520 = vmatpush1.xpose.msra.mxu0 0.0
        %521 = vmatprep.subr.mxu0 0.0
        %522 = vmatpush1.xpose.msra.mxu0 0.0
        %523 = vmatprep.subr.mxu0 0.0
        %524 = vmatpush1.xpose.msra.mxu0 0.0
        %525 = vmatprep.subr.mxu0 0.0
        %526 = vmatpush1.xpose.msra.mxu0 0.0
        %527 = vmatprep.subr.mxu0 0.0
        %528 = vmatpush1.xpose.msra.mxu0 0.0
        %529 = vmatprep.subr.mxu0 0.0
        %530 = vmatpush1.xpose.msra.mxu0 0.0
        %531 = vmatprep.subr.mxu0 0.0
        %532 = vmatpush1.xpose.msra.mxu0 0.0
        %533 = vmatprep.subr.mxu0 0.0
        %534 = vmatpush1.xpose.msra.mxu0 0.0
        %535 = vmatprep.subr.mxu0 0.0
        %536 = vmatpush1.xpose.msra.mxu0 0.0
        %537 = vmatprep.subr.mxu0 0.0
        %538 = vmatpush1.xpose.msra.mxu0 0.0
        %539 = vmatprep.subr.mxu0 0.0
        %540 = vmatpush1.xpose.msra.mxu0 0.0
        %541 = vmatprep.subr.mxu0 0.0
        %542 = vmatpush1.xpose.msra.mxu0 0.0
        %543 = vmatprep.subr.mxu0 0.0
        %544 = vmatpush1.xpose.msra.mxu0 0.0
        %545 = vmatprep.subr.mxu0 0.0
        %546 = vmatpush1.xpose.msra.mxu0 0.0
        %547 = vmatprep.mubr.f32.mxu0 0.0
        %548 = vmatmul.mubr.f32.gmra.mrb[0].mxu0 %v475
        %v549 = vpop.f32.mrb[0].mxu0
        %v550 = vadd.f32 0.0, %v549
        %v551 = vpop.f32.mrb[0].mxu0
        %552 = vmatprep.mubr.f32.mxu0 0.0
        %553 = vmatmul.mubr.f32.gmra.mrb[0].mxu0 %v477
        %v554 = vpop.f32.mrb[0].mxu0
        %v555 = vadd.f32 0.0, %v554
        %v556 = vpop.f32.mrb[0].mxu0
        %557 = vdwg.mxu0
        %558 = vrot.lane.b32.xlu0 %v461, 124
        %v559 = vpop.permute.xlu0 %558
        %560 = vrot.lane.b32.xlu0 %v464, 124
        %v561 = vpop.permute.xlu0 %560
        %562 = vrot.lane.b32.xlu0 %v461, 92
        %v563 = vpop.permute.xlu0 %562
        %564 = vrot.lane.b32.xlu0 %v464, 92
        %v565 = vpop.permute.xlu0 %564
        %v566 = vsel %vm474, %v559, 0
        %v568 = vsel %vm474, %v561, 0
        %v570 = vsel %vm474, %v563, 0
        %v572 = vsel %vm474, %v565, 0
        %574 = vmatprep.subr.mxu0 0.0
        %575 = vmatpush1.xpose.msra.mxu0 %v570
        %576 = vmatprep.subr.mxu0 0.0
        %577 = vmatpush1.xpose.msra.mxu0 %v572
        %578 = vmatprep.subr.mxu0 0.0
        %579 = vmatpush1.xpose.msra.mxu0 0.0
        %580 = vmatprep.subr.mxu0 0.0
        %581 = vmatpush1.xpose.msra.mxu0 0.0
        %582 = vmatprep.subr.mxu0 0.0
        %583 = vmatpush1.xpose.msra.mxu0 0.0
        %584 = vmatprep.subr.mxu0 0.0
        %585 = vmatpush1.xpose.msra.mxu0 0.0
        %586 = vmatprep.subr.mxu0 0.0
        %587 = vmatpush1.xpose.msra.mxu0 0.0
        %588 = vmatprep.subr.mxu0 0.0
        %589 = vmatpush1.xpose.msra.mxu0 0.0
        %590 = vmatprep.subr.mxu0 0.0
        %591 = vmatpush1.xpose.msra.mxu0 0.0
        %592 = vmatprep.subr.mxu0 0.0
        %593 = vmatpush1.xpose.msra.mxu0 0.0
        %594 = vmatprep.subr.mxu0 0.0
        %595 = vmatpush1.xpose.msra.mxu0 0.0
        %596 = vmatprep.subr.mxu0 0.0
        %597 = vmatpush1.xpose.msra.mxu0 0.0
        %598 = vmatprep.subr.mxu0 0.0
        %599 = vmatpush1.xpose.msra.mxu0 0.0
        %600 = vmatprep.subr.mxu0 0.0
        %601 = vmatpush1.xpose.msra.mxu0 0.0
        %602 = vmatprep.subr.mxu0 0.0
        %603 = vmatpush1.xpose.msra.mxu0 0.0
        %604 = vmatprep.subr.mxu0 0.0
        %605 = vmatpush1.xpose.msra.mxu0 0.0
        %606 = vmatprep.subr.mxu0 0.0
        %607 = vmatpush1.xpose.msra.mxu0 0.0
        %608 = vmatprep.subr.mxu0 0.0
        %609 = vmatpush1.xpose.msra.mxu0 0.0
        %610 = vmatprep.subr.mxu0 0.0
        %611 = vmatpush1.xpose.msra.mxu0 0.0
        %612 = vmatprep.subr.mxu0 0.0
        %613 = vmatpush1.xpose.msra.mxu0 0.0
        %614 = vmatprep.subr.mxu0 0.0
        %615 = vmatpush1.xpose.msra.mxu0 0.0
        %616 = vmatprep.subr.mxu0 0.0
        %617 = vmatpush1.xpose.msra.mxu0 0.0
        %618 = vmatprep.subr.mxu0 0.0
        %619 = vmatpush1.xpose.msra.mxu0 0.0
        %620 = vmatprep.subr.mxu0 0.0
        %621 = vmatpush1.xpose.msra.mxu0 0.0
        %622 = vmatprep.subr.mxu0 0.0
        %623 = vmatpush1.xpose.msra.mxu0 0.0
        %624 = vmatprep.subr.mxu0 0.0
        %625 = vmatpush1.xpose.msra.mxu0 0.0
        %626 = vmatprep.subr.mxu0 0.0
        %627 = vmatpush1.xpose.msra.mxu0 0.0
        %628 = vmatprep.subr.mxu0 0.0
        %629 = vmatpush1.xpose.msra.mxu0 0.0
        %630 = vmatprep.subr.mxu0 0.0
        %631 = vmatpush1.xpose.msra.mxu0 0.0
        %632 = vmatprep.subr.mxu0 0.0
        %633 = vmatpush1.xpose.msra.mxu0 0.0
        %634 = vmatprep.subr.mxu0 0.0
        %635 = vmatpush1.xpose.msra.mxu0 0.0
        %636 = vmatprep.subr.mxu0 0.0
        %637 = vmatpush1.xpose.msra.mxu0 0.0
        %638 = vmatprep.mubr.f32.mxu0 0.0
        %639 = vmatmul.mubr.f32.gmra.mrb[0].mxu0 %v566
        %v640 = vpop.f32.mrb[0].mxu0
        %v641 = vadd.f32 0.0, %v640
        %v642 = vpop.f32.mrb[0].mxu0
        %643 = vmatprep.mubr.f32.mxu0 0.0
        %644 = vmatmul.mubr.f32.gmra.mrb[0].mxu0 %v568
        %v645 = vpop.f32.mrb[0].mxu0
        %v646 = vadd.f32 0.0, %v645
        %v647 = vpop.f32.mrb[0].mxu0
        %648 = vdwg.mxu0
        %649 = vrot.lane.b32.xlu0 %v461, 120
        %v650 = vpop.permute.xlu0 %649
        %651 = vrot.lane.b32.xlu0 %v464, 120
        %v652 = vpop.permute.xlu0 %651
        %653 = vrot.lane.b32.xlu0 %v461, 88
        %v654 = vpop.permute.xlu0 %653
        %655 = vrot.lane.b32.xlu0 %v464, 88
        %v656 = vpop.permute.xlu0 %655
        %v657 = vsel %vm474, %v650, 0
        %v659 = vsel %vm474, %v652, 0
        %v661 = vsel %vm474, %v654, 0
        %v663 = vsel %vm474, %v656, 0
        %665 = vmatprep.subr.mxu0 0.0
        %666 = vmatpush1.xpose.msra.mxu0 %v661
        %667 = vmatprep.subr.mxu0 0.0
        %668 = vmatpush1.xpose.msra.mxu0 %v663
        %669 = vmatprep.subr.mxu0 0.0
        %670 = vmatpush1.xpose.msra.mxu0 0.0
        %671 = vmatprep.subr.mxu0 0.0
        %672 = vmatpush1.xpose.msra.mxu0 0.0
        %673 = vmatprep.subr.mxu0 0.0
        %674 = vmatpush1.xpose.msra.mxu0 0.0
        %675 = vmatprep.subr.mxu0 0.0
        %676 = vmatpush1.xpose.msra.mxu0 0.0
        %677 = vmatprep.subr.mxu0 0.0
        %678 = vmatpush1.xpose.msra.mxu0 0.0
        %679 = vmatprep.subr.mxu0 0.0
        %680 = vmatpush1.xpose.msra.mxu0 0.0
        %681 = vmatprep.subr.mxu0 0.0
        %682 = vmatpush1.xpose.msra.mxu0 0.0
        %683 = vmatprep.subr.mxu0 0.0
        %684 = vmatpush1.xpose.msra.mxu0 0.0
        %685 = vmatprep.subr.mxu0 0.0
        %686 = vmatpush1.xpose.msra.mxu0 0.0
        %687 = vmatprep.subr.mxu0 0.0
        %688 = vmatpush1.xpose.msra.mxu0 0.0
        %689 = vmatprep.subr.mxu0 0.0
        %690 = vmatpush1.xpose.msra.mxu0 0.0
        %691 = vmatprep.subr.mxu0 0.0
        %692 = vmatpush1.xpose.msra.mxu0 0.0
        %693 = vmatprep.subr.mxu0 0.0
        %694 = vmatpush1.xpose.msra.mxu0 0.0
        %695 = vmatprep.subr.mxu0 0.0
        %696 = vmatpush1.xpose.msra.mxu0 0.0
        %697 = vmatprep.subr.mxu0 0.0
        %698 = vmatpush1.xpose.msra.mxu0 0.0
        %699 = vmatprep.subr.mxu0 0.0
        %700 = vmatpush1.xpose.msra.mxu0 0.0
        %701 = vmatprep.subr.mxu0 0.0
        %702 = vmatpush1.xpose.msra.mxu0 0.0
        %703 = vmatprep.subr.mxu0 0.0
        %704 = vmatpush1.xpose.msra.mxu0 0.0
        %705 = vmatprep.subr.mxu0 0.0
        %706 = vmatpush1.xpose.msra.mxu0 0.0
        %707 = vmatprep.subr.mxu0 0.0
        %708 = vmatpush1.xpose.msra.mxu0 0.0
        %709 = vmatprep.subr.mxu0 0.0
        %710 = vmatpush1.xpose.msra.mxu0 0.0
        %711 = vmatprep.subr.mxu0 0.0
        %712 = vmatpush1.xpose.msra.mxu0 0.0
        %713 = vmatprep.subr.mxu0 0.0
        %714 = vmatpush1.xpose.msra.mxu0 0.0
        %715 = vmatprep.subr.mxu0 0.0
        %716 = vmatpush1.xpose.msra.mxu0 0.0
        %717 = vmatprep.subr.mxu0 0.0
        %718 = vmatpush1.xpose.msra.mxu0 0.0
        %719 = vmatprep.subr.mxu0 0.0
        %720 = vmatpush1.xpose.msra.mxu0 0.0
        %721 = vmatprep.subr.mxu0 0.0
        %722 = vmatpush1.xpose.msra.mxu0 0.0
        %723 = vmatprep.subr.mxu0 0.0
        %724 = vmatpush1.xpose.msra.mxu0 0.0
        %725 = vmatprep.subr.mxu0 0.0
        %726 = vmatpush1.xpose.msra.mxu0 0.0
        %727 = vmatprep.subr.mxu0 0.0
        %728 = vmatpush1.xpose.msra.mxu0 0.0
        %729 = vmatprep.mubr.f32.mxu0 0.0
        %730 = vmatmul.mubr.f32.gmra.mrb[0].mxu0 %v657
        %v731 = vpop.f32.mrb[0].mxu0
        %v732 = vadd.f32 0.0, %v731
        %v733 = vpop.f32.mrb[0].mxu0
        %734 = vmatprep.mubr.f32.mxu0 0.0
        %735 = vmatmul.mubr.f32.gmra.mrb[0].mxu0 %v659
        %v736 = vpop.f32.mrb[0].mxu0
        %v737 = vadd.f32 0.0, %v736
        %v738 = vpop.f32.mrb[0].mxu0
        %739 = vdwg.mxu0
        %740 = vrot.lane.b32.xlu0 %v461, 116
        %v741 = vpop.permute.xlu0 %740
        %742 = vrot.lane.b32.xlu0 %v464, 116
        %v743 = vpop.permute.xlu0 %742
        %744 = vrot.lane.b32.xlu0 %v461, 84
        %v745 = vpop.permute.xlu0 %744
        %746 = vrot.lane.b32.xlu0 %v464, 84
        %v747 = vpop.permute.xlu0 %746
        %v748 = vsel %vm474, %v741, 0
        %v750 = vsel %vm474, %v743, 0
        %v752 = vsel %vm474, %v745, 0
        %v754 = vsel %vm474, %v747, 0
        %756 = vmatprep.subr.mxu0 0.0
        %757 = vmatpush1.xpose.msra.mxu0 %v752
        %758 = vmatprep.subr.mxu0 0.0
        %759 = vmatpush1.xpose.msra.mxu0 %v754
        %760 = vmatprep.subr.mxu0 0.0
        %761 = vmatpush1.xpose.msra.mxu0 0.0
        %762 = vmatprep.subr.mxu0 0.0
        %763 = vmatpush1.xpose.msra.mxu0 0.0
        %764 = vmatprep.subr.mxu0 0.0
        %765 = vmatpush1.xpose.msra.mxu0 0.0
        %766 = vmatprep.subr.mxu0 0.0
        %767 = vmatpush1.xpose.msra.mxu0 0.0
        %768 = vmatprep.subr.mxu0 0.0
        %769 = vmatpush1.xpose.msra.mxu0 0.0
        %770 = vmatprep.subr.mxu0 0.0
        %771 = vmatpush1.xpose.msra.mxu0 0.0
        %772 = vmatprep.subr.mxu0 0.0
        %773 = vmatpush1.xpose.msra.mxu0 0.0
        %774 = vmatprep.subr.mxu0 0.0
        %775 = vmatpush1.xpose.msra.mxu0 0.0
        %776 = vmatprep.subr.mxu0 0.0
        %777 = vmatpush1.xpose.msra.mxu0 0.0
        %778 = vmatprep.subr.mxu0 0.0
        %779 = vmatpush1.xpose.msra.mxu0 0.0
        %780 = vmatprep.subr.mxu0 0.0
        %781 = vmatpush1.xpose.msra.mxu0 0.0
        %782 = vmatprep.subr.mxu0 0.0
        %783 = vmatpush1.xpose.msra.mxu0 0.0
        %784 = vmatprep.subr.mxu0 0.0
        %785 = vmatpush1.xpose.msra.mxu0 0.0
        %786 = vmatprep.subr.mxu0 0.0
        %787 = vmatpush1.xpose.msra.mxu0 0.0
        %788 = vmatprep.subr.mxu0 0.0
        %789 = vmatpush1.xpose.msra.mxu0 0.0
        %790 = vmatprep.subr.mxu0 0.0
        %791 = vmatpush1.xpose.msra.mxu0 0.0
        %792 = vmatprep.subr.mxu0 0.0
        %793 = vmatpush1.xpose.msra.mxu0 0.0
        %794 = vmatprep.subr.mxu0 0.0
        %795 = vmatpush1.xpose.msra.mxu0 0.0
        %796 = vmatprep.subr.mxu0 0.0
        %797 = vmatpush1.xpose.msra.mxu0 0.0
        %798 = vmatprep.subr.mxu0 0.0
        %799 = vmatpush1.xpose.msra.mxu0 0.0
        %800 = vmatprep.subr.mxu0 0.0
        %801 = vmatpush1.xpose.msra.mxu0 0.0
        %802 = vmatprep.subr.mxu0 0.0
        %803 = vmatpush1.xpose.msra.mxu0 0.0
        %804 = vmatprep.subr.mxu0 0.0
        %805 = vmatpush1.xpose.msra.mxu0 0.0
        %806 = vmatprep.subr.mxu0 0.0
        %807 = vmatpush1.xpose.msra.mxu0 0.0
        %808 = vmatprep.subr.mxu0 0.0
        %809 = vmatpush1.xpose.msra.mxu0 0.0
        %810 = vmatprep.subr.mxu0 0.0
        %811 = vmatpush1.xpose.msra.mxu0 0.0
        %812 = vmatprep.subr.mxu0 0.0
        %813 = vmatpush1.xpose.msra.mxu0 0.0
        %814 = vmatprep.subr.mxu0 0.0
        %815 = vmatpush1.xpose.msra.mxu0 0.0
        %816 = vmatprep.subr.mxu0 0.0
        %817 = vmatpush1.xpose.msra.mxu0 0.0
        %818 = vmatprep.subr.mxu0 0.0
        %819 = vmatpush1.xpose.msra.mxu0 0.0
        %820 = vmatprep.mubr.f32.mxu0 0.0
        %821 = vmatmul.mubr.f32.gmra.mrb[0].mxu0 %v748
        %v822 = vpop.f32.mrb[0].mxu0
        %v823 = vadd.f32 0.0, %v822
        %v824 = vpop.f32.mrb[0].mxu0
        %825 = vmatprep.mubr.f32.mxu0 0.0
        %826 = vmatmul.mubr.f32.gmra.mrb[0].mxu0 %v750
        %v827 = vpop.f32.mrb[0].mxu0
        %v828 = vadd.f32 0.0, %v827
        %v829 = vpop.f32.mrb[0].mxu0
        %830 = vdwg.mxu0
        %831 = vrot.lane.b32.xlu0 %v461, 112
        %v832 = vpop.permute.xlu0 %831
        %833 = vrot.lane.b32.xlu0 %v464, 112
        %v834 = vpop.permute.xlu0 %833
        %835 = vrot.lane.b32.xlu0 %v461, 80
        %v836 = vpop.permute.xlu0 %835
        %837 = vrot.lane.b32.xlu0 %v464, 80
        %v838 = vpop.permute.xlu0 %837
        %v839 = vsel %vm474, %v832, 0
        %v841 = vsel %vm474, %v834, 0
        %v843 = vsel %vm474, %v836, 0
        %v845 = vsel %vm474, %v838, 0
        %847 = vmatprep.subr.mxu0 0.0
        %848 = vmatpush1.xpose.msra.mxu0 %v843
        %849 = vmatprep.subr.mxu0 0.0
        %850 = vmatpush1.xpose.msra.mxu0 %v845
        %851 = vmatprep.subr.mxu0 0.0
        %852 = vmatpush1.xpose.msra.mxu0 0.0
        %853 = vmatprep.subr.mxu0 0.0
        %854 = vmatpush1.xpose.msra.mxu0 0.0
        %855 = vmatprep.subr.mxu0 0.0
        %856 = vmatpush1.xpose.msra.mxu0 0.0
        %857 = vmatprep.subr.mxu0 0.0
        %858 = vmatpush1.xpose.msra.mxu0 0.0
        %859 = vmatprep.subr.mxu0 0.0
        %860 = vmatpush1.xpose.msra.mxu0 0.0
        %861 = vmatprep.subr.mxu0 0.0
        %862 = vmatpush1.xpose.msra.mxu0 0.0
        %863 = vmatprep.subr.mxu0 0.0
        %864 = vmatpush1.xpose.msra.mxu0 0.0
        %865 = vmatprep.subr.mxu0 0.0
        %866 = vmatpush1.xpose.msra.mxu0 0.0
        %867 = vmatprep.subr.mxu0 0.0
        %868 = vmatpush1.xpose.msra.mxu0 0.0
        %869 = vmatprep.subr.mxu0 0.0
        %870 = vmatpush1.xpose.msra.mxu0 0.0
        %871 = vmatprep.subr.mxu0 0.0
        %872 = vmatpush1.xpose.msra.mxu0 0.0
        %873 = vmatprep.subr.mxu0 0.0
        %874 = vmatpush1.xpose.msra.mxu0 0.0
        %875 = vmatprep.subr.mxu0 0.0
        %876 = vmatpush1.xpose.msra.mxu0 0.0
        %877 = vmatprep.subr.mxu0 0.0
        %878 = vmatpush1.xpose.msra.mxu0 0.0
        %879 = vmatprep.subr.mxu0 0.0
        %880 = vmatpush1.xpose.msra.mxu0 0.0
        %881 = vmatprep.subr.mxu0 0.0
        %882 = vmatpush1.xpose.msra.mxu0 0.0
        %883 = vmatprep.subr.mxu0 0.0
        %884 = vmatpush1.xpose.msra.mxu0 0.0
        %885 = vmatprep.subr.mxu0 0.0
        %886 = vmatpush1.xpose.msra.mxu0 0.0
        %887 = vmatprep.subr.mxu0 0.0
        %888 = vmatpush1.xpose.msra.mxu0 0.0
        %889 = vmatprep.subr.mxu0 0.0
        %890 = vmatpush1.xpose.msra.mxu0 0.0
        %891 = vmatprep.subr.mxu0 0.0
        %892 = vmatpush1.xpose.msra.mxu0 0.0
        %893 = vmatprep.subr.mxu0 0.0
        %894 = vmatpush1.xpose.msra.mxu0 0.0
        %895 = vmatprep.subr.mxu0 0.0
        %896 = vmatpush1.xpose.msra.mxu0 0.0
        %897 = vmatprep.subr.mxu0 0.0
        %898 = vmatpush1.xpose.msra.mxu0 0.0
        %899 = vmatprep.subr.mxu0 0.0
        %900 = vmatpush1.xpose.msra.mxu0 0.0
        %901 = vmatprep.subr.mxu0 0.0
        %902 = vmatpush1.xpose.msra.mxu0 0.0
        %903 = vmatprep.subr.mxu0 0.0
        %904 = vmatpush1.xpose.msra.mxu0 0.0
        %905 = vmatprep.subr.mxu0 0.0
        %906 = vmatpush1.xpose.msra.mxu0 0.0
        %907 = vmatprep.subr.mxu0 0.0
        %908 = vmatpush1.xpose.msra.mxu0 0.0
        %909 = vmatprep.subr.mxu0 0.0
        %910 = vmatpush1.xpose.msra.mxu0 0.0
        %911 = vmatprep.mubr.f32.mxu0 0.0
        %912 = vmatmul.mubr.f32.gmra.mrb[0].mxu0 %v839
        %v913 = vpop.f32.mrb[0].mxu0
        %v914 = vadd.f32 0.0, %v913
        %v915 = vpop.f32.mrb[0].mxu0
        %916 = vmatprep.mubr.f32.mxu0 0.0
        %917 = vmatmul.mubr.f32.gmra.mrb[0].mxu0 %v841
        %v918 = vpop.f32.mrb[0].mxu0
        %v919 = vadd.f32 0.0, %v918
        %v920 = vpop.f32.mrb[0].mxu0
        %921 = vdwg.mxu0
        %922 = vrot.lane.b32.xlu0 %v461, 108
        %v923 = vpop.permute.xlu0 %922
        %924 = vrot.lane.b32.xlu0 %v464, 108
        %v925 = vpop.permute.xlu0 %924
        %926 = vrot.lane.b32.xlu0 %v461, 76
        %v927 = vpop.permute.xlu0 %926
        %928 = vrot.lane.b32.xlu0 %v464, 76
        %v929 = vpop.permute.xlu0 %928
        %v930 = vsel %vm474, %v923, 0
        %v932 = vsel %vm474, %v925, 0
        %v934 = vsel %vm474, %v927, 0
        %v936 = vsel %vm474, %v929, 0
        %938 = vmatprep.subr.mxu0 0.0
        %939 = vmatpush1.xpose.msra.mxu0 %v934
        %940 = vmatprep.subr.mxu0 0.0
        %941 = vmatpush1.xpose.msra.mxu0 %v936
        %942 = vmatprep.subr.mxu0 0.0
        %943 = vmatpush1.xpose.msra.mxu0 0.0
        %944 = vmatprep.subr.mxu0 0.0
        %945 = vmatpush1.xpose.msra.mxu0 0.0
        %946 = vmatprep.subr.mxu0 0.0
        %947 = vmatpush1.xpose.msra.mxu0 0.0
        %948 = vmatprep.subr.mxu0 0.0
        %949 = vmatpush1.xpose.msra.mxu0 0.0
        %950 = vmatprep.subr.mxu0 0.0
        %951 = vmatpush1.xpose.msra.mxu0 0.0
        %952 = vmatprep.subr.mxu0 0.0
        %953 = vmatpush1.xpose.msra.mxu0 0.0
        %954 = vmatprep.subr.mxu0 0.0
        %955 = vmatpush1.xpose.msra.mxu0 0.0
        %956 = vmatprep.subr.mxu0 0.0
        %957 = vmatpush1.xpose.msra.mxu0 0.0
        %958 = vmatprep.subr.mxu0 0.0
        %959 = vmatpush1.xpose.msra.mxu0 0.0
        %960 = vmatprep.subr.mxu0 0.0
        %961 = vmatpush1.xpose.msra.mxu0 0.0
        %962 = vmatprep.subr.mxu0 0.0
        %963 = vmatpush1.xpose.msra.mxu0 0.0
        %964 = vmatprep.subr.mxu0 0.0
        %965 = vmatpush1.xpose.msra.mxu0 0.0
        %966 = vmatprep.subr.mxu0 0.0
        %967 = vmatpush1.xpose.msra.mxu0 0.0
        %968 = vmatprep.subr.mxu0 0.0
        %969 = vmatpush1.xpose.msra.mxu0 0.0
        %970 = vmatprep.subr.mxu0 0.0
        %971 = vmatpush1.xpose.msra.mxu0 0.0
        %972 = vmatprep.subr.mxu0 0.0
        %973 = vmatpush1.xpose.msra.mxu0 0.0
        %974 = vmatprep.subr.mxu0 0.0
        %975 = vmatpush1.xpose.msra.mxu0 0.0
        %976 = vmatprep.subr.mxu0 0.0
        %977 = vmatpush1.xpose.msra.mxu0 0.0
        %978 = vmatprep.subr.mxu0 0.0
        %979 = vmatpush1.xpose.msra.mxu0 0.0
        %980 = vmatprep.subr.mxu0 0.0
        %981 = vmatpush1.xpose.msra.mxu0 0.0
        %982 = vmatprep.subr.mxu0 0.0
        %983 = vmatpush1.xpose.msra.mxu0 0.0
        %984 = vmatprep.subr.mxu0 0.0
        %985 = vmatpush1.xpose.msra.mxu0 0.0
        %986 = vmatprep.subr.mxu0 0.0
        %987 = vmatpush1.xpose.msra.mxu0 0.0
        %988 = vmatprep.subr.mxu0 0.0
        %989 = vmatpush1.xpose.msra.mxu0 0.0
        %990 = vmatprep.subr.mxu0 0.0
        %991 = vmatpush1.xpose.msra.mxu0 0.0
        %992 = vmatprep.subr.mxu0 0.0
        %993 = vmatpush1.xpose.msra.mxu0 0.0
        %994 = vmatprep.subr.mxu0 0.0
        %995 = vmatpush1.xpose.msra.mxu0 0.0
        %996 = vmatprep.subr.mxu0 0.0
        %997 = vmatpush1.xpose.msra.mxu0 0.0
        %998 = vmatprep.subr.mxu0 0.0
        %999 = vmatpush1.xpose.msra.mxu0 0.0
        %1000 = vmatprep.subr.mxu0 0.0
        %1001 = vmatpush1.xpose.msra.mxu0 0.0
        %1002 = vmatprep.mubr.f32.mxu0 0.0
        %1003 = vmatmul.mubr.f32.gmra.mrb[0].mxu0 %v930
        %v1004 = vpop.f32.mrb[0].mxu0
        %v1005 = vadd.f32 0.0, %v1004
        %v1006 = vpop.f32.mrb[0].mxu0
        %1007 = vmatprep.mubr.f32.mxu0 0.0
        %1008 = vmatmul.mubr.f32.gmra.mrb[0].mxu0 %v932
        %v1009 = vpop.f32.mrb[0].mxu0
        %v1010 = vadd.f32 0.0, %v1009
        %v1011 = vpop.f32.mrb[0].mxu0
        %1012 = vdwg.mxu0
        %1013 = vrot.lane.b32.xlu0 %v461, 104
        %v1014 = vpop.permute.xlu0 %1013
        %1015 = vrot.lane.b32.xlu0 %v464, 104
        %v1016 = vpop.permute.xlu0 %1015
        %1017 = vrot.lane.b32.xlu0 %v461, 72
        %v1018 = vpop.permute.xlu0 %1017
        %1019 = vrot.lane.b32.xlu0 %v464, 72
        %v1020 = vpop.permute.xlu0 %1019
        %v1021 = vsel %vm474, %v1014, 0
        %v1023 = vsel %vm474, %v1016, 0
        %v1025 = vsel %vm474, %v1018, 0
        %v1027 = vsel %vm474, %v1020, 0
        %1029 = vmatprep.subr.mxu0 0.0
        %1030 = vmatpush1.xpose.msra.mxu0 %v1025
        %1031 = vmatprep.subr.mxu0 0.0
        %1032 = vmatpush1.xpose.msra.mxu0 %v1027
        %1033 = vmatprep.subr.mxu0 0.0
        %1034 = vmatpush1.xpose.msra.mxu0 0.0
        %1035 = vmatprep.subr.mxu0 0.0
        %1036 = vmatpush1.xpose.msra.mxu0 0.0
        %1037 = vmatprep.subr.mxu0 0.0
        %1038 = vmatpush1.xpose.msra.mxu0 0.0
        %1039 = vmatprep.subr.mxu0 0.0
        %1040 = vmatpush1.xpose.msra.mxu0 0.0
        %1041 = vmatprep.subr.mxu0 0.0
        %1042 = vmatpush1.xpose.msra.mxu0 0.0
        %1043 = vmatprep.subr.mxu0 0.0
        %1044 = vmatpush1.xpose.msra.mxu0 0.0
        %1045 = vmatprep.subr.mxu0 0.0
        %1046 = vmatpush1.xpose.msra.mxu0 0.0
        %1047 = vmatprep.subr.mxu0 0.0
        %1048 = vmatpush1.xpose.msra.mxu0 0.0
        %1049 = vmatprep.subr.mxu0 0.0
        %1050 = vmatpush1.xpose.msra.mxu0 0.0
        %1051 = vmatprep.subr.mxu0 0.0
        %1052 = vmatpush1.xpose.msra.mxu0 0.0
        %1053 = vmatprep.subr.mxu0 0.0
        %1054 = vmatpush1.xpose.msra.mxu0 0.0
        %1055 = vmatprep.subr.mxu0 0.0
        %1056 = vmatpush1.xpose.msra.mxu0 0.0
        %1057 = vmatprep.subr.mxu0 0.0
        %1058 = vmatpush1.xpose.msra.mxu0 0.0
        %1059 = vmatprep.subr.mxu0 0.0
        %1060 = vmatpush1.xpose.msra.mxu0 0.0
        %1061 = vmatprep.subr.mxu0 0.0
        %1062 = vmatpush1.xpose.msra.mxu0 0.0
        %1063 = vmatprep.subr.mxu0 0.0
        %1064 = vmatpush1.xpose.msra.mxu0 0.0
        %1065 = vmatprep.subr.mxu0 0.0
        %1066 = vmatpush1.xpose.msra.mxu0 0.0
        %1067 = vmatprep.subr.mxu0 0.0
        %1068 = vmatpush1.xpose.msra.mxu0 0.0
        %1069 = vmatprep.subr.mxu0 0.0
        %1070 = vmatpush1.xpose.msra.mxu0 0.0
        %1071 = vmatprep.subr.mxu0 0.0
        %1072 = vmatpush1.xpose.msra.mxu0 0.0
        %1073 = vmatprep.subr.mxu0 0.0
        %1074 = vmatpush1.xpose.msra.mxu0 0.0
        %1075 = vmatprep.subr.mxu0 0.0
        %1076 = vmatpush1.xpose.msra.mxu0 0.0
        %1077 = vmatprep.subr.mxu0 0.0
        %1078 = vmatpush1.xpose.msra.mxu0 0.0
        %1079 = vmatprep.subr.mxu0 0.0
        %1080 = vmatpush1.xpose.msra.mxu0 0.0
        %1081 = vmatprep.subr.mxu0 0.0
        %1082 = vmatpush1.xpose.msra.mxu0 0.0
        %1083 = vmatprep.subr.mxu0 0.0
        %1084 = vmatpush1.xpose.msra.mxu0 0.0
        %1085 = vmatprep.subr.mxu0 0.0
        %1086 = vmatpush1.xpose.msra.mxu0 0.0
        %1087 = vmatprep.subr.mxu0 0.0
        %1088 = vmatpush1.xpose.msra.mxu0 0.0
        %1089 = vmatprep.subr.mxu0 0.0
        %1090 = vmatpush1.xpose.msra.mxu0 0.0
        %1091 = vmatprep.subr.mxu0 0.0
        %1092 = vmatpush1.xpose.msra.mxu0 0.0
        %1093 = vmatprep.mubr.f32.mxu0 0.0
        %1094 = vmatmul.mubr.f32.gmra.mrb[0].mxu0 %v1021
        %v1095 = vpop.f32.mrb[0].mxu0
        %v1096 = vadd.f32 0.0, %v1095
        %v1097 = vpop.f32.mrb[0].mxu0
        %1098 = vmatprep.mubr.f32.mxu0 0.0
        %1099 = vmatmul.mubr.f32.gmra.mrb[0].mxu0 %v1023
        %v1100 = vpop.f32.mrb[0].mxu0
        %v1101 = vadd.f32 0.0, %v1100
        %v1102 = vpop.f32.mrb[0].mxu0
        %1103 = vdwg.mxu0
        %1104 = vrot.lane.b32.xlu0 %v461, 100
        %v1105 = vpop.permute.xlu0 %1104
        %1106 = vrot.lane.b32.xlu0 %v464, 100
        %v1107 = vpop.permute.xlu0 %1106
        %1108 = vrot.lane.b32.xlu0 %v461, 68
        %v1109 = vpop.permute.xlu0 %1108
        %1110 = vrot.lane.b32.xlu0 %v464, 68
        %v1111 = vpop.permute.xlu0 %1110
        %v1112 = vsel %vm474, %v1105, 0
        %v1114 = vsel %vm474, %v1107, 0
        %v1116 = vsel %vm474, %v1109, 0
        %v1118 = vsel %vm474, %v1111, 0
        %1120 = vmatprep.subr.mxu0 0.0
        %1121 = vmatpush1.xpose.msra.mxu0 %v1116
        %1122 = vmatprep.subr.mxu0 0.0
        %1123 = vmatpush1.xpose.msra.mxu0 %v1118
        %1124 = vmatprep.subr.mxu0 0.0
        %1125 = vmatpush1.xpose.msra.mxu0 0.0
        %1126 = vmatprep.subr.mxu0 0.0
        %1127 = vmatpush1.xpose.msra.mxu0 0.0
        %1128 = vmatprep.subr.mxu0 0.0
        %1129 = vmatpush1.xpose.msra.mxu0 0.0
        %1130 = vmatprep.subr.mxu0 0.0
        %1131 = vmatpush1.xpose.msra.mxu0 0.0
        %1132 = vmatprep.subr.mxu0 0.0
        %1133 = vmatpush1.xpose.msra.mxu0 0.0
        %1134 = vmatprep.subr.mxu0 0.0
        %1135 = vmatpush1.xpose.msra.mxu0 0.0
        %1136 = vmatprep.subr.mxu0 0.0
        %1137 = vmatpush1.xpose.msra.mxu0 0.0
        %1138 = vmatprep.subr.mxu0 0.0
        %1139 = vmatpush1.xpose.msra.mxu0 0.0
        %1140 = vmatprep.subr.mxu0 0.0
        %1141 = vmatpush1.xpose.msra.mxu0 0.0
        %1142 = vmatprep.subr.mxu0 0.0
        %1143 = vmatpush1.xpose.msra.mxu0 0.0
        %1144 = vmatprep.subr.mxu0 0.0
        %1145 = vmatpush1.xpose.msra.mxu0 0.0
        %1146 = vmatprep.subr.mxu0 0.0
        %1147 = vmatpush1.xpose.msra.mxu0 0.0
        %1148 = vmatprep.subr.mxu0 0.0
        %1149 = vmatpush1.xpose.msra.mxu0 0.0
        %1150 = vmatprep.subr.mxu0 0.0
        %1151 = vmatpush1.xpose.msra.mxu0 0.0
        %1152 = vmatprep.subr.mxu0 0.0
        %1153 = vmatpush1.xpose.msra.mxu0 0.0
        %1154 = vmatprep.subr.mxu0 0.0
        %1155 = vmatpush1.xpose.msra.mxu0 0.0
        %1156 = vmatprep.subr.mxu0 0.0
        %1157 = vmatpush1.xpose.msra.mxu0 0.0
        %1158 = vmatprep.subr.mxu0 0.0
        %1159 = vmatpush1.xpose.msra.mxu0 0.0
        %1160 = vmatprep.subr.mxu0 0.0
        %1161 = vmatpush1.xpose.msra.mxu0 0.0
        %1162 = vmatprep.subr.mxu0 0.0
        %1163 = vmatpush1.xpose.msra.mxu0 0.0
        %1164 = vmatprep.subr.mxu0 0.0
        %1165 = vmatpush1.xpose.msra.mxu0 0.0
        %1166 = vmatprep.subr.mxu0 0.0
        %1167 = vmatpush1.xpose.msra.mxu0 0.0
        %1168 = vmatprep.subr.mxu0 0.0
        %1169 = vmatpush1.xpose.msra.mxu0 0.0
        %1170 = vmatprep.subr.mxu0 0.0
        %1171 = vmatpush1.xpose.msra.mxu0 0.0
        %1172 = vmatprep.subr.mxu0 0.0
        %1173 = vmatpush1.xpose.msra.mxu0 0.0
        %1174 = vmatprep.subr.mxu0 0.0
        %1175 = vmatpush1.xpose.msra.mxu0 0.0
        %1176 = vmatprep.subr.mxu0 0.0
        %1177 = vmatpush1.xpose.msra.mxu0 0.0
        %1178 = vmatprep.subr.mxu0 0.0
        %1179 = vmatpush1.xpose.msra.mxu0 0.0
        %1180 = vmatprep.subr.mxu0 0.0
        %1181 = vmatpush1.xpose.msra.mxu0 0.0
        %1182 = vmatprep.subr.mxu0 0.0
        %1183 = vmatpush1.xpose.msra.mxu0 0.0
        %1184 = vmatprep.mubr.f32.mxu0 0.0
        %1185 = vmatmul.mubr.f32.gmra.mrb[0].mxu0 %v1112
        %v1186 = vpop.f32.mrb[0].mxu0
        %v1187 = vadd.f32 0.0, %v1186
        %v1188 = vpop.f32.mrb[0].mxu0
        %1189 = vmatprep.mubr.f32.mxu0 0.0
        %1190 = vmatmul.mubr.f32.gmra.mrb[0].mxu0 %v1114
        %v1191 = vpop.f32.mrb[0].mxu0
        %v1192 = vadd.f32 0.0, %v1191
        %v1193 = vpop.f32.mrb[0].mxu0
        %1194 = vdwg.mxu0
        %v1195 = vld [vmem:[%s1] sm:$0xff]
        %v1196 = vld [vmem:[%s1 + $0x8] sm:$0xff]
        %v1197 = vadd.f32 %v550, %v1195
        %v1198 = vadd.f32 %v555, %v1196
        %v1199 = vadd.f32 %v641, %v1195
        %v1200 = vadd.f32 %v646, %v1196
        %v1201 = vadd.f32 %v732, %v1195
        %v1202 = vadd.f32 %v737, %v1196
        %v1203 = vadd.f32 %v823, %v1195
        %v1204 = vadd.f32 %v828, %v1196
        %v1205 = vadd.f32 %v914, %v1195
        %v1206 = vadd.f32 %v919, %v1196
        %v1207 = vadd.f32 %v1005, %v1195
        %v1208 = vadd.f32 %v1010, %v1196
        %v1209 = vadd.f32 %v1096, %v1195
        %v1210 = vadd.f32 %v1101, %v1196
        %v1211 = vadd.f32 %v1187, %v1195
        %v1212 = vadd.f32 %v1192, %v1196
        %vm1213 = vcmask 130048
        %v1214 = vsel %vm1213, %v1197, -inf
        %1215 = vmax.xlane.f32.xlu0 %v1214
        %v1216 = vpop.xlane.xlu0 %1215
        %v1217 = vsel %vm1213, %v1198, -inf
        %1218 = vmax.xlane.f32.xlu0 %v1217
        %v1219 = vpop.xlane.xlu0 %1218
        %v1220 = vsel %vm1213, %v1199, -inf
        %1221 = vmax.xlane.f32.xlu0 %v1220
        %v1222 = vpop.xlane.xlu0 %1221
        %v1223 = vsel %vm1213, %v1200, -inf
        %1224 = vmax.xlane.f32.xlu0 %v1223
        %v1225 = vpop.xlane.xlu0 %1224
        %v1226 = vsel %vm1213, %v1201, -inf
        %1227 = vmax.xlane.f32.xlu0 %v1226
        %v1228 = vpop.xlane.xlu0 %1227
        %v1229 = vsel %vm1213, %v1202, -inf
        %1230 = vmax.xlane.f32.xlu0 %v1229
        %v1231 = vpop.xlane.xlu0 %1230
        %v1232 = vsel %vm1213, %v1203, -inf
        %1233 = vmax.xlane.f32.xlu0 %v1232
        %v1234 = vpop.xlane.xlu0 %1233
        %v1235 = vsel %vm1213, %v1204, -inf
        %1236 = vmax.xlane.f32.xlu0 %v1235
        %v1237 = vpop.xlane.xlu0 %1236
        %v1238 = vsel %vm1213, %v1205, -inf
        %1239 = vmax.xlane.f32.xlu0 %v1238
        %v1240 = vpop.xlane.xlu0 %1239
        %v1241 = vsel %vm1213, %v1206, -inf
        %1242 = vmax.xlane.f32.xlu0 %v1241
        %v1243 = vpop.xlane.xlu0 %1242
        %v1244 = vsel %vm1213, %v1207, -inf
        %1245 = vmax.xlane.f32.xlu0 %v1244
        %v1246 = vpop.xlane.xlu0 %1245
        %v1247 = vsel %vm1213, %v1208, -inf
        %1248 = vmax.xlane.f32.xlu0 %v1247
        %v1249 = vpop.xlane.xlu0 %1248
        %v1250 = vsel %vm1213, %v1209, -inf
        %1251 = vmax.xlane.f32.xlu0 %v1250
        %v1252 = vpop.xlane.xlu0 %1251
        %v1253 = vsel %vm1213, %v1210, -inf
        %1254 = vmax.xlane.f32.xlu0 %v1253
        %v1255 = vpop.xlane.xlu0 %1254
        %v1256 = vsel %vm1213, %v1211, -inf
        %1257 = vmax.xlane.f32.xlu0 %v1256
        %v1258 = vpop.xlane.xlu0 %1257
        %v1259 = vsel %vm1213, %v1212, -inf
        %1260 = vmax.xlane.f32.xlu0 %v1259
        %v1261 = vpop.xlane.xlu0 %1260
        %v1262 = vsub.f32 %v1197, %v1216
        %v1263 = vsub.f32 %v1198, %v1219
        %v1264 = vsub.f32 %v1199, %v1222
        %v1265 = vsub.f32 %v1200, %v1225
        %v1266 = vsub.f32 %v1201, %v1228
        %v1267 = vsub.f32 %v1202, %v1231
        %v1268 = vsub.f32 %v1203, %v1234
        %v1269 = vsub.f32 %v1204, %v1237
        %v1270 = vsub.f32 %v1205, %v1240
        %v1271 = vsub.f32 %v1206, %v1243
        %v1272 = vsub.f32 %v1207, %v1246
        %v1273 = vsub.f32 %v1208, %v1249
        %v1274 = vsub.f32 %v1209, %v1252
        %v1275 = vsub.f32 %v1210, %v1255
        %v1276 = vsub.f32 %v1211, %v1258
        %v1277 = vsub.f32 %v1212, %v1261
        %v1278 = vmul.f32 %v1262, 1.442695
        %v1279 = vpow.pop %v1278
        %v1280 = vmul.f32 %v1263, 1.442695
        %v1281 = vpow.pop %v1280
        %v1282 = vmul.f32 %v1264, 1.442695
        %v1283 = vpow.pop %v1282
        %v1284 = vmul.f32 %v1265, 1.442695
        %v1285 = vpow.pop %v1284
        %v1286 = vmul.f32 %v1266, 1.442695
        %v1287 = vpow.pop %v1286
        %v1288 = vmul.f32 %v1267, 1.442695
        %v1289 = vpow.pop %v1288
        %v1290 = vmul.f32 %v1268, 1.442695
        %v1291 = vpow.pop %v1290
        %v1292 = vmul.f32 %v1269, 1.442695
        %v1293 = vpow.pop %v1292
        %v1294 = vmul.f32 %v1270, 1.442695
        %v1295 = vpow.pop %v1294
        %v1296 = vmul.f32 %v1271, 1.442695
        %v1297 = vpow.pop %v1296
        %v1298 = vmul.f32 %v1272, 1.442695
        %v1299 = vpow.pop %v1298
        %v1300 = vmul.f32 %v1273, 1.442695
        %v1301 = vpow.pop %v1300
        %v1302 = vmul.f32 %v1274, 1.442695
        %v1303 = vpow.pop %v1302
        %v1304 = vmul.f32 %v1275, 1.442695
        %v1305 = vpow.pop %v1304
        %v1306 = vmul.f32 %v1276, 1.442695
        %v1307 = vpow.pop %v1306
        %v1308 = vmul.f32 %v1277, 1.442695
        %v1309 = vpow.pop %v1308
        %v1310 = vsel %vm1213, %v1279, 0.0
        %1311 = vadd.xlane.f32.xlu0 %v1310
        %v1312 = vpop.xlane.xlu0 %1311
        %v1313 = vsel %vm1213, %v1281, 0.0
        %1314 = vadd.xlane.f32.xlu0 %v1313
        %v1315 = vpop.xlane.xlu0 %1314
        %v1316 = vsel %vm1213, %v1283, 0.0
        %1317 = vadd.xlane.f32.xlu0 %v1316
        %v1318 = vpop.xlane.xlu0 %1317
        %v1319 = vsel %vm1213, %v1285, 0.0
        %1320 = vadd.xlane.f32.xlu0 %v1319
        %v1321 = vpop.xlane.xlu0 %1320
        %v1322 = vsel %vm1213, %v1287, 0.0
        %1323 = vadd.xlane.f32.xlu0 %v1322
        %v1324 = vpop.xlane.xlu0 %1323
        %v1325 = vsel %vm1213, %v1289, 0.0
        %1326 = vadd.xlane.f32.xlu0 %v1325
        %v1327 = vpop.xlane.xlu0 %1326
        %v1328 = vsel %vm1213, %v1291, 0.0
        %1329 = vadd.xlane.f32.xlu0 %v1328
        %v1330 = vpop.xlane.xlu0 %1329
        %v1331 = vsel %vm1213, %v1293, 0.0
        %1332 = vadd.xlane.f32.xlu0 %v1331
        %v1333 = vpop.xlane.xlu0 %1332
        %v1334 = vsel %vm1213, %v1295, 0.0
        %1335 = vadd.xlane.f32.xlu0 %v1334
        %v1336 = vpop.xlane.xlu0 %1335
        %v1337 = vsel %vm1213, %v1297, 0.0
        %1338 = vadd.xlane.f32.xlu0 %v1337
        %v1339 = vpop.xlane.xlu0 %1338
        %v1340 = vsel %vm1213, %v1299, 0.0
        %1341 = vadd.xlane.f32.xlu0 %v1340
        %v1342 = vpop.xlane.xlu0 %1341
        %v1343 = vsel %vm1213, %v1301, 0.0
        %1344 = vadd.xlane.f32.xlu0 %v1343
        %v1345 = vpop.xlane.xlu0 %1344
        %v1346 = vsel %vm1213, %v1303, 0.0
        %1347 = vadd.xlane.f32.xlu0 %v1346
        %v1348 = vpop.xlane.xlu0 %1347
        %v1349 = vsel %vm1213, %v1305, 0.0
        %1350 = vadd.xlane.f32.xlu0 %v1349
        %v1351 = vpop.xlane.xlu0 %1350
        %v1352 = vsel %vm1213, %v1307, 0.0
        %1353 = vadd.xlane.f32.xlu0 %v1352
        %v1354 = vpop.xlane.xlu0 %1353
        %v1355 = vsel %vm1213, %v1309, 0.0
        %1356 = vadd.xlane.f32.xlu0 %v1355
        %v1357 = vpop.xlane.xlu0 %1356
        %v1358 = vrcp.pop %v1312
        %v1359 = vrcp.pop %v1315
        %v1360 = vrcp.pop %v1318
        %v1361 = vrcp.pop %v1321
        %v1362 = vrcp.pop %v1324
        %v1363 = vrcp.pop %v1327
        %v1364 = vrcp.pop %v1330
        %v1365 = vrcp.pop %v1333
        %v1366 = vrcp.pop %v1336
        %v1367 = vrcp.pop %v1339
        %v1368 = vrcp.pop %v1342
        %v1369 = vrcp.pop %v1345
        %v1370 = vrcp.pop %v1348
        %v1371 = vrcp.pop %v1351
        %v1372 = vrcp.pop %v1354
        %v1373 = vrcp.pop %v1357
        %v1374 = vmul.f32 %v1279, %v1358
        %v1375 = vmul.f32 %v1281, %v1359
        %v1376 = vmul.f32 %v1283, %v1360
        %v1377 = vmul.f32 %v1285, %v1361
        %v1378 = vmul.f32 %v1287, %v1362
        %v1379 = vmul.f32 %v1289, %v1363
        %v1380 = vmul.f32 %v1291, %v1364
        %v1381 = vmul.f32 %v1293, %v1365
        %v1382 = vmul.f32 %v1295, %v1366
        %v1383 = vmul.f32 %v1297, %v1367
        %v1384 = vmul.f32 %v1299, %v1368
        %v1385 = vmul.f32 %v1301, %v1369
        %v1386 = vmul.f32 %v1303, %v1370
        %v1387 = vmul.f32 %v1305, %v1371
        %v1388 = vmul.f32 %v1307, %v1372
        %v1389 = vmul.f32 %v1309, %v1373
        %v1390 = vpack.c.bf16 %v1375, %v1374
        %v1391 = vpack.c.bf16 %v1377, %v1376
        %v1392 = vpack.c.bf16 %v1379, %v1378
        %v1393 = vpack.c.bf16 %v1381, %v1380
        %v1394 = vpack.c.bf16 %v1383, %v1382
        %v1395 = vpack.c.bf16 %v1385, %v1384
        %v1396 = vpack.c.bf16 %v1387, %v1386
        %v1397 = vpack.c.bf16 %v1389, %v1388
        %1399 = vrot.lane.b32.xlu0 %v467, 64
        %v1400 = vpop.permute.xlu0 %1399
        %v1403 = vsel %vm1213, %v1390, 0
        %1405 = vmatprep.subr.bf16.mxu0 0
        %1406 = vmatpush1.bf16.msra.mxu0 %v1400
        %1407 = vmatprep.subr.bf16.mxu0 0
        %1408 = vmatpush1.bf16.msra.mxu0 0
        %1409 = vmatprep.subr.bf16.mxu0 0
        %1410 = vmatpush1.bf16.msra.mxu0 0
        %1411 = vmatprep.subr.bf16.mxu0 0
        %1412 = vmatpush1.bf16.msra.mxu0 0
        %1413 = vmatprep.subr.bf16.mxu0 0
        %1414 = vmatpush1.bf16.msra.mxu0 0
        %1415 = vmatprep.subr.bf16.mxu0 0
        %1416 = vmatpush1.bf16.msra.mxu0 0
        %1417 = vmatprep.subr.bf16.mxu0 0
        %1418 = vmatpush1.bf16.msra.mxu0 0
        %1419 = vmatprep.subr.bf16.mxu0 0
        %1420 = vmatpush1.bf16.msra.mxu0 0
        %1421 = vmatprep.subr.bf16.mxu0 0
        %1422 = vmatpush1.bf16.msra.mxu0 0
        %1423 = vmatprep.subr.bf16.mxu0 0
        %1424 = vmatpush1.bf16.msra.mxu0 0
        %1425 = vmatprep.subr.bf16.mxu0 0
        %1426 = vmatpush1.bf16.msra.mxu0 0
        %1427 = vmatprep.subr.bf16.mxu0 0
        %1428 = vmatpush1.bf16.msra.mxu0 0
        %1429 = vmatprep.subr.bf16.mxu0 0
        %1430 = vmatpush1.bf16.msra.mxu0 0
        %1431 = vmatprep.subr.bf16.mxu0 0
        %1432 = vmatpush1.bf16.msra.mxu0 0
        %1433 = vmatprep.subr.bf16.mxu0 0
        %1434 = vmatpush1.bf16.msra.mxu0 0
        %1435 = vmatprep.subr.bf16.mxu0 0
        %1436 = vmatpush1.bf16.msra.mxu0 0
        %1437 = vmatprep.mubr.bf16.mxu0 0
        %1438 = vmatmul.mubr.bf16.gmra.mrb[0].mxu0 %v1403
        %v1439 = vpop.f32.mrb[0].mxu0
        %v1440 = vadd.f32 0.0, %v1439
        %v1441 = vpop.f32.mrb[0].mxu0
        %v1442 = vpop.f32.mrb[0].mxu0
        %v1443 = vadd.f32 0.0, %v1442
        %v1444 = vpop.f32.mrb[0].mxu0
        %1445 = vdwg.mxu0
        %1446 = vrot.lane.b32.xlu0 %v467, 60
        %v1447 = vpop.permute.xlu0 %1446
        %v1450 = vsel %vm1213, %v1391, 0
        %1452 = vmatprep.subr.bf16.mxu0 0
        %1453 = vmatpush1.bf16.msra.mxu0 %v1447
        %1454 = vmatprep.subr.bf16.mxu0 0
        %1455 = vmatpush1.bf16.msra.mxu0 0
        %1456 = vmatprep.subr.bf16.mxu0 0
        %1457 = vmatpush1.bf16.msra.mxu0 0
        %1458 = vmatprep.subr.bf16.mxu0 0
        %1459 = vmatpush1.bf16.msra.mxu0 0
        %1460 = vmatprep.subr.bf16.mxu0 0
        %1461 = vmatpush1.bf16.msra.mxu0 0
        %1462 = vmatprep.subr.bf16.mxu0 0
        %1463 = vmatpush1.bf16.msra.mxu0 0
        %1464 = vmatprep.subr.bf16.mxu0 0
        %1465 = vmatpush1.bf16.msra.mxu0 0
        %1466 = vmatprep.subr.bf16.mxu0 0
        %1467 = vmatpush1.bf16.msra.mxu0 0
        %1468 = vmatprep.subr.bf16.mxu0 0
        %1469 = vmatpush1.bf16.msra.mxu0 0
        %1470 = vmatprep.subr.bf16.mxu0 0
        %1471 = vmatpush1.bf16.msra.mxu0 0
        %1472 = vmatprep.subr.bf16.mxu0 0
        %1473 = vmatpush1.bf16.msra.mxu0 0
        %1474 = vmatprep.subr.bf16.mxu0 0
        %1475 = vmatpush1.bf16.msra.mxu0 0
        %1476 = vmatprep.subr.bf16.mxu0 0
        %1477 = vmatpush1.bf16.msra.mxu0 0
        %1478 = vmatprep.subr.bf16.mxu0 0
        %1479 = vmatpush1.bf16.msra.mxu0 0
        %1480 = vmatprep.subr.bf16.mxu0 0
        %1481 = vmatpush1.bf16.msra.mxu0 0
        %1482 = vmatprep.subr.bf16.mxu0 0
        %1483 = vmatpush1.bf16.msra.mxu0 0
        %1484 = vmatprep.mubr.bf16.mxu0 0
        %1485 = vmatmul.mubr.bf16.gmra.mrb[0].mxu0 %v1450
        %v1486 = vpop.f32.mrb[0].mxu0
        %v1487 = vadd.f32 0.0, %v1486
        %v1488 = vpop.f32.mrb[0].mxu0
        %v1489 = vpop.f32.mrb[0].mxu0
        %v1490 = vadd.f32 0.0, %v1489
        %v1491 = vpop.f32.mrb[0].mxu0
        %1492 = vdwg.mxu0
        %1493 = vrot.lane.b32.xlu0 %v467, 56
        %v1494 = vpop.permute.xlu0 %1493
        %v1497 = vsel %vm1213, %v1392, 0
        %1499 = vmatprep.subr.bf16.mxu0 0
        %1500 = vmatpush1.bf16.msra.mxu0 %v1494
        %1501 = vmatprep.subr.bf16.mxu0 0
        %1502 = vmatpush1.bf16.msra.mxu0 0
        %1503 = vmatprep.subr.bf16.mxu0 0
        %1504 = vmatpush1.bf16.msra.mxu0 0
        %1505 = vmatprep.subr.bf16.mxu0 0
        %1506 = vmatpush1.bf16.msra.mxu0 0
        %1507 = vmatprep.subr.bf16.mxu0 0
        %1508 = vmatpush1.bf16.msra.mxu0 0
        %1509 = vmatprep.subr.bf16.mxu0 0
        %1510 = vmatpush1.bf16.msra.mxu0 0
        %1511 = vmatprep.subr.bf16.mxu0 0
        %1512 = vmatpush1.bf16.msra.mxu0 0
        %1513 = vmatprep.subr.bf16.mxu0 0
        %1514 = vmatpush1.bf16.msra.mxu0 0
        %1515 = vmatprep.subr.bf16.mxu0 0
        %1516 = vmatpush1.bf16.msra.mxu0 0
        %1517 = vmatprep.subr.bf16.mxu0 0
        %1518 = vmatpush1.bf16.msra.mxu0 0
        %1519 = vmatprep.subr.bf16.mxu0 0
        %1520 = vmatpush1.bf16.msra.mxu0 0
        %1521 = vmatprep.subr.bf16.mxu0 0
        %1522 = vmatpush1.bf16.msra.mxu0 0
        %1523 = vmatprep.subr.bf16.mxu0 0
        %1524 = vmatpush1.bf16.msra.mxu0 0
        %1525 = vmatprep.subr.bf16.mxu0 0
        %1526 = vmatpush1.bf16.msra.mxu0 0
        %1527 = vmatprep.subr.bf16.mxu0 0
        %1528 = vmatpush1.bf16.msra.mxu0 0
        %1529 = vmatprep.subr.bf16.mxu0 0
        %1530 = vmatpush1.bf16.msra.mxu0 0
        %1531 = vmatprep.mubr.bf16.mxu0 0
        %1532 = vmatmul.mubr.bf16.gmra.mrb[0].mxu0 %v1497
        %v1533 = vpop.f32.mrb[0].mxu0
        %v1534 = vadd.f32 0.0, %v1533
        %v1535 = vpop.f32.mrb[0].mxu0
        %v1536 = vpop.f32.mrb[0].mxu0
        %v1537 = vadd.f32 0.0, %v1536
        %v1538 = vpop.f32.mrb[0].mxu0
        %1539 = vdwg.mxu0
        %1540 = vrot.lane.b32.xlu0 %v467, 52
        %v1541 = vpop.permute.xlu0 %1540
        %v1544 = vsel %vm1213, %v1393, 0
        %1546 = vmatprep.subr.bf16.mxu0 0
        %1547 = vmatpush1.bf16.msra.mxu0 %v1541
        %1548 = vmatprep.subr.bf16.mxu0 0
        %1549 = vmatpush1.bf16.msra.mxu0 0
        %1550 = vmatprep.subr.bf16.mxu0 0
        %1551 = vmatpush1.bf16.msra.mxu0 0
        %1552 = vmatprep.subr.bf16.mxu0 0
        %1553 = vmatpush1.bf16.msra.mxu0 0
        %1554 = vmatprep.subr.bf16.mxu0 0
        %1555 = vmatpush1.bf16.msra.mxu0 0
        %1556 = vmatprep.subr.bf16.mxu0 0
        %1557 = vmatpush1.bf16.msra.mxu0 0
        %1558 = vmatprep.subr.bf16.mxu0 0
        %1559 = vmatpush1.bf16.msra.mxu0 0
        %1560 = vmatprep.subr.bf16.mxu0 0
        %1561 = vmatpush1.bf16.msra.mxu0 0
        %1562 = vmatprep.subr.bf16.mxu0 0
        %1563 = vmatpush1.bf16.msra.mxu0 0
        %1564 = vmatprep.subr.bf16.mxu0 0
        %1565 = vmatpush1.bf16.msra.mxu0 0
        %1566 = vmatprep.subr.bf16.mxu0 0
        %1567 = vmatpush1.bf16.msra.mxu0 0
        %1568 = vmatprep.subr.bf16.mxu0 0
        %1569 = vmatpush1.bf16.msra.mxu0 0
        %1570 = vmatprep.subr.bf16.mxu0 0
        %1571 = vmatpush1.bf16.msra.mxu0 0
        %1572 = vmatprep.subr.bf16.mxu0 0
        %1573 = vmatpush1.bf16.msra.mxu0 0
        %1574 = vmatprep.subr.bf16.mxu0 0
        %1575 = vmatpush1.bf16.msra.mxu0 0
        %1576 = vmatprep.subr.bf16.mxu0 0
        %1577 = vmatpush1.bf16.msra.mxu0 0
        %1578 = vmatprep.mubr.bf16.mxu0 0
        %1579 = vmatmul.mubr.bf16.gmra.mrb[0].mxu0 %v1544
        %v1580 = vpop.f32.mrb[0].mxu0
        %v1581 = vadd.f32 0.0, %v1580
        %v1582 = vpop.f32.mrb[0].mxu0
        %v1583 = vpop.f32.mrb[0].mxu0
        %v1584 = vadd.f32 0.0, %v1583
        %v1585 = vpop.f32.mrb[0].mxu0
        %1586 = vdwg.mxu0
        %1587 = vrot.lane.b32.xlu0 %v467, 48
        %v1588 = vpop.permute.xlu0 %1587
        %v1591 = vsel %vm1213, %v1394, 0
        %1593 = vmatprep.subr.bf16.mxu0 0
        %1594 = vmatpush1.bf16.msra.mxu0 %v1588
        %1595 = vmatprep.subr.bf16.mxu0 0
        %1596 = vmatpush1.bf16.msra.mxu0 0
        %1597 = vmatprep.subr.bf16.mxu0 0
        %1598 = vmatpush1.bf16.msra.mxu0 0
        %1599 = vmatprep.subr.bf16.mxu0 0
        %1600 = vmatpush1.bf16.msra.mxu0 0
        %1601 = vmatprep.subr.bf16.mxu0 0
        %1602 = vmatpush1.bf16.msra.mxu0 0
        %1603 = vmatprep.subr.bf16.mxu0 0
        %1604 = vmatpush1.bf16.msra.mxu0 0
        %1605 = vmatprep.subr.bf16.mxu0 0
        %1606 = vmatpush1.bf16.msra.mxu0 0
        %1607 = vmatprep.subr.bf16.mxu0 0
        %1608 = vmatpush1.bf16.msra.mxu0 0
        %1609 = vmatprep.subr.bf16.mxu0 0
        %1610 = vmatpush1.bf16.msra.mxu0 0
        %1611 = vmatprep.subr.bf16.mxu0 0
        %1612 = vmatpush1.bf16.msra.mxu0 0
        %1613 = vmatprep.subr.bf16.mxu0 0
        %1614 = vmatpush1.bf16.msra.mxu0 0
        %1615 = vmatprep.subr.bf16.mxu0 0
        %1616 = vmatpush1.bf16.msra.mxu0 0
        %1617 = vmatprep.subr.bf16.mxu0 0
        %1618 = vmatpush1.bf16.msra.mxu0 0
        %1619 = vmatprep.subr.bf16.mxu0 0
        %1620 = vmatpush1.bf16.msra.mxu0 0
        %1621 = vmatprep.subr.bf16.mxu0 0
        %1622 = vmatpush1.bf16.msra.mxu0 0
        %1623 = vmatprep.subr.bf16.mxu0 0
        %1624 = vmatpush1.bf16.msra.mxu0 0
        %1625 = vmatprep.mubr.bf16.mxu0 0
        %1626 = vmatmul.mubr.bf16.gmra.mrb[0].mxu0 %v1591
        %v1627 = vpop.f32.mrb[0].mxu0
        %v1628 = vadd.f32 0.0, %v1627
        %v1629 = vpop.f32.mrb[0].mxu0
        %v1630 = vpop.f32.mrb[0].mxu0
        %v1631 = vadd.f32 0.0, %v1630
        %v1632 = vpop.f32.mrb[0].mxu0
        %1633 = vdwg.mxu0
        %1634 = vrot.lane.b32.xlu0 %v467, 44
        %v1635 = vpop.permute.xlu0 %1634
        %v1638 = vsel %vm1213, %v1395, 0
        %1640 = vmatprep.subr.bf16.mxu0 0
        %1641 = vmatpush1.bf16.msra.mxu0 %v1635
        %1642 = vmatprep.subr.bf16.mxu0 0
        %1643 = vmatpush1.bf16.msra.mxu0 0
        %1644 = vmatprep.subr.bf16.mxu0 0
        %1645 = vmatpush1.bf16.msra.mxu0 0
        %1646 = vmatprep.subr.bf16.mxu0 0
        %1647 = vmatpush1.bf16.msra.mxu0 0
        %1648 = vmatprep.subr.bf16.mxu0 0
        %1649 = vmatpush1.bf16.msra.mxu0 0
        %1650 = vmatprep.subr.bf16.mxu0 0
        %1651 = vmatpush1.bf16.msra.mxu0 0
        %1652 = vmatprep.subr.bf16.mxu0 0
        %1653 = vmatpush1.bf16.msra.mxu0 0
        %1654 = vmatprep.subr.bf16.mxu0 0
        %1655 = vmatpush1.bf16.msra.mxu0 0
        %1656 = vmatprep.subr.bf16.mxu0 0
        %1657 = vmatpush1.bf16.msra.mxu0 0
        %1658 = vmatprep.subr.bf16.mxu0 0
        %1659 = vmatpush1.bf16.msra.mxu0 0
        %1660 = vmatprep.subr.bf16.mxu0 0
        %1661 = vmatpush1.bf16.msra.mxu0 0
        %1662 = vmatprep.subr.bf16.mxu0 0
        %1663 = vmatpush1.bf16.msra.mxu0 0
        %1664 = vmatprep.subr.bf16.mxu0 0
        %1665 = vmatpush1.bf16.msra.mxu0 0
        %1666 = vmatprep.subr.bf16.mxu0 0
        %1667 = vmatpush1.bf16.msra.mxu0 0
        %1668 = vmatprep.subr.bf16.mxu0 0
        %1669 = vmatpush1.bf16.msra.mxu0 0
        %1670 = vmatprep.subr.bf16.mxu0 0
        %1671 = vmatpush1.bf16.msra.mxu0 0
        %1672 = vmatprep.mubr.bf16.mxu0 0
        %1673 = vmatmul.mubr.bf16.gmra.mrb[0].mxu0 %v1638
        %v1674 = vpop.f32.mrb[0].mxu0
        %v1675 = vadd.f32 0.0, %v1674
        %v1676 = vpop.f32.mrb[0].mxu0
        %v1677 = vpop.f32.mrb[0].mxu0
        %v1678 = vadd.f32 0.0, %v1677
        %v1679 = vpop.f32.mrb[0].mxu0
        %1680 = vdwg.mxu0
        %1681 = vrot.lane.b32.xlu0 %v467, 40
        %v1682 = vpop.permute.xlu0 %1681
        %v1685 = vsel %vm1213, %v1396, 0
        %1687 = vmatprep.subr.bf16.mxu0 0
        %1688 = vmatpush1.bf16.msra.mxu0 %v1682
        %1689 = vmatprep.subr.bf16.mxu0 0
        %1690 = vmatpush1.bf16.msra.mxu0 0
        %1691 = vmatprep.subr.bf16.mxu0 0
        %1692 = vmatpush1.bf16.msra.mxu0 0
        %1693 = vmatprep.subr.bf16.mxu0 0
        %1694 = vmatpush1.bf16.msra.mxu0 0
        %1695 = vmatprep.subr.bf16.mxu0 0
        %1696 = vmatpush1.bf16.msra.mxu0 0
        %1697 = vmatprep.subr.bf16.mxu0 0
        %1698 = vmatpush1.bf16.msra.mxu0 0
        %1699 = vmatprep.subr.bf16.mxu0 0
        %1700 = vmatpush1.bf16.msra.mxu0 0
        %1701 = vmatprep.subr.bf16.mxu0 0
        %1702 = vmatpush1.bf16.msra.mxu0 0
        %1703 = vmatprep.subr.bf16.mxu0 0
        %1704 = vmatpush1.bf16.msra.mxu0 0
        %1705 = vmatprep.subr.bf16.mxu0 0
        %1706 = vmatpush1.bf16.msra.mxu0 0
        %1707 = vmatprep.subr.bf16.mxu0 0
        %1708 = vmatpush1.bf16.msra.mxu0 0
        %1709 = vmatprep.subr.bf16.mxu0 0
        %1710 = vmatpush1.bf16.msra.mxu0 0
        %1711 = vmatprep.subr.bf16.mxu0 0
        %1712 = vmatpush1.bf16.msra.mxu0 0
        %1713 = vmatprep.subr.bf16.mxu0 0
        %1714 = vmatpush1.bf16.msra.mxu0 0
        %1715 = vmatprep.subr.bf16.mxu0 0
        %1716 = vmatpush1.bf16.msra.mxu0 0
        %1717 = vmatprep.subr.bf16.mxu0 0
        %1718 = vmatpush1.bf16.msra.mxu0 0
        %1719 = vmatprep.mubr.bf16.mxu0 0
        %1720 = vmatmul.mubr.bf16.gmra.mrb[0].mxu0 %v1685
        %v1721 = vpop.f32.mrb[0].mxu0
        %v1722 = vadd.f32 0.0, %v1721
        %v1723 = vpop.f32.mrb[0].mxu0
        %v1724 = vpop.f32.mrb[0].mxu0
        %v1725 = vadd.f32 0.0, %v1724
        %v1726 = vpop.f32.mrb[0].mxu0
        %1727 = vdwg.mxu0
        %1728 = vrot.lane.b32.xlu0 %v467, 36
        %v1729 = vpop.permute.xlu0 %1728
        %v1732 = vsel %vm1213, %v1397, 0
        %1734 = vmatprep.subr.bf16.mxu0 0
        %1735 = vmatpush1.bf16.msra.mxu0 %v1729
        %1736 = vmatprep.subr.bf16.mxu0 0
        %1737 = vmatpush1.bf16.msra.mxu0 0
        %1738 = vmatprep.subr.bf16.mxu0 0
        %1739 = vmatpush1.bf16.msra.mxu0 0
        %1740 = vmatprep.subr.bf16.mxu0 0
        %1741 = vmatpush1.bf16.msra.mxu0 0
        %1742 = vmatprep.subr.bf16.mxu0 0
        %1743 = vmatpush1.bf16.msra.mxu0 0
        %1744 = vmatprep.subr.bf16.mxu0 0
        %1745 = vmatpush1.bf16.msra.mxu0 0
        %1746 = vmatprep.subr.bf16.mxu0 0
        %1747 = vmatpush1.bf16.msra.mxu0 0
        %1748 = vmatprep.subr.bf16.mxu0 0
        %1749 = vmatpush1.bf16.msra.mxu0 0
        %1750 = vmatprep.subr.bf16.mxu0 0
        %1751 = vmatpush1.bf16.msra.mxu0 0
        %1752 = vmatprep.subr.bf16.mxu0 0
        %1753 = vmatpush1.bf16.msra.mxu0 0
        %1754 = vmatprep.subr.bf16.mxu0 0
        %1755 = vmatpush1.bf16.msra.mxu0 0
        %1756 = vmatprep.subr.bf16.mxu0 0
        %1757 = vmatpush1.bf16.msra.mxu0 0
        %1758 = vmatprep.subr.bf16.mxu0 0
        %1759 = vmatpush1.bf16.msra.mxu0 0
        %1760 = vmatprep.subr.bf16.mxu0 0
        %1761 = vmatpush1.bf16.msra.mxu0 0
        %1762 = vmatprep.subr.bf16.mxu0 0
        %1763 = vmatpush1.bf16.msra.mxu0 0
        %1764 = vmatprep.subr.bf16.mxu0 0
        %1765 = vmatpush1.bf16.msra.mxu0 0
        %1766 = vmatprep.mubr.bf16.mxu0 0
        %1767 = vmatmul.mubr.bf16.gmra.mrb[0].mxu0 %v1732
        %v1768 = vpop.f32.mrb[0].mxu0
        %v1769 = vadd.f32 0.0, %v1768
        %v1770 = vpop.f32.mrb[0].mxu0
        %v1771 = vpop.f32.mrb[0].mxu0
        %v1772 = vadd.f32 0.0, %v1771
        %v1773 = vpop.f32.mrb[0].mxu0
        %1774 = vdwg.mxu0
        %1777 = vrot.lane.b32.xlu0 %v1487, 4
        %v1778 = vpop.permute.xlu0 %1777
        %1779 = vrot.lane.b32.xlu0 %v1490, 4
        %v1780 = vpop.permute.xlu0 %1779
        %1785 = vrot.lane.b32.xlu0 %v1534, 8
        %v1786 = vpop.permute.xlu0 %1785
        %1787 = vrot.lane.b32.xlu0 %v1537, 8
        %v1788 = vpop.permute.xlu0 %1787
        %1793 = vrot.lane.b32.xlu0 %v1581, 12
        %v1794 = vpop.permute.xlu0 %1793
        %1795 = vrot.lane.b32.xlu0 %v1584, 12
        %v1796 = vpop.permute.xlu0 %1795
        %1801 = vrot.lane.b32.xlu0 %v1628, 16
        %v1802 = vpop.permute.xlu0 %1801
        %1803 = vrot.lane.b32.xlu0 %v1631, 16
        %v1804 = vpop.permute.xlu0 %1803
        %1809 = vrot.lane.b32.xlu0 %v1675, 20
        %v1810 = vpop.permute.xlu0 %1809
        %1811 = vrot.lane.b32.xlu0 %v1678, 20
        %v1812 = vpop.permute.xlu0 %1811
        %1817 = vrot.lane.b32.xlu0 %v1722, 24
        %v1818 = vpop.permute.xlu0 %1817
        %1819 = vrot.lane.b32.xlu0 %v1725, 24
        %v1820 = vpop.permute.xlu0 %1819
        %1825 = vrot.lane.b32.xlu0 %v1769, 28
        %v1826 = vpop.permute.xlu0 %1825
        %1827 = vrot.lane.b32.xlu0 %v1772, 28
        %v1828 = vpop.permute.xlu0 %1827
        %v1831 = vsel %vm474, %v1440, %v1778
        %v1832 = vsel %vm474, %v1443, %v1780
        %vm1833 = vcmask 64512
        %v1834 = vsel %vm1833, %v1831, %v1786
        %v1835 = vsel %vm1833, %v1832, %v1788
        %vm1836 = vcmask 97280
        %v1837 = vsel %vm1836, %v1834, %v1794
        %v1838 = vsel %vm1836, %v1835, %v1796
        %v1839 = vsel %vm1213, %v1837, %v1802
        %v1840 = vsel %vm1213, %v1838, %v1804
        %vm1841 = vcmask 162816
        %v1842 = vsel %vm1841, %v1839, %v1810
        %v1843 = vsel %vm1841, %v1840, %v1812
        %vm1844 = vcmask 195584
        %v1845 = vsel %vm1844, %v1842, %v1818
        %v1846 = vsel %vm1844, %v1843, %v1820
        %vm1847 = vcmask 228352
        %v1848 = vsel %vm1847, %v1845, %v1826
        %v1849 = vsel %vm1847, %v1846, %v1828
        %v1850 = vpack.c.bf16 %v1849, %v1848
        %v1851 = vld [vmem:[#allocation5] sm:$0xf]
        %v1852 = vld [vmem:[#allocation5 + $0x4] sm:$0xf]
        %v1853 = vld [vmem:[#allocation5 + $0x8] sm:$0xf]
        %v1854 = vld [vmem:[#allocation5 + $0xc] sm:$0xf]
        %v1855 = vlaneseq
        %v1856 = vshrl.u32 %v1855, 7
        %v1857 = vsub.s32 2, %v1856
        %v1858 = vrot.slane %v364, %v1857
        %v1863 = vunpack.c.l.b16 %v1851
        %v1864 = vunpack.c.l.b16 %v1852
        %v1865 = vunpack.c.l.b16 %v1853
        %v1866 = vunpack.c.l.b16 %v1854
        %v1867 = vpack.c.b16 %v1864, %v1863
        %v1868 = vpack.c.b16 %v1866, %v1865
        %v1872 = vsel %vm366, %v1850, 0
        %1874 = vmatprep.subr.bf16.mxu0 0
        %1875 = vmatpush1.bf16.msra.mxu0 %v1867
        %1876 = vmatprep.subr.bf16.mxu0 0
        %1877 = vmatpush1.bf16.msra.mxu0 %v1868
        %1878 = vmatprep.subr.bf16.mxu0 0
        %1879 = vmatpush1.bf16.msra.mxu0 0
        %1880 = vmatprep.subr.bf16.mxu0 0
        %1881 = vmatpush1.bf16.msra.mxu0 0
        %1882 = vmatprep.subr.bf16.mxu0 0
        %1883 = vmatpush1.bf16.msra.mxu0 0
        %1884 = vmatprep.subr.bf16.mxu0 0
        %1885 = vmatpush1.bf16.msra.mxu0 0
        %1886 = vmatprep.subr.bf16.mxu0 0
        %1887 = vmatpush1.bf16.msra.mxu0 0
        %1888 = vmatprep.subr.bf16.mxu0 0
        %1889 = vmatpush1.bf16.msra.mxu0 0
        %1890 = vmatprep.subr.bf16.mxu0 0
        %1891 = vmatpush1.bf16.msra.mxu0 0
        %1892 = vmatprep.subr.bf16.mxu0 0
        %1893 = vmatpush1.bf16.msra.mxu0 0
        %1894 = vmatprep.subr.bf16.mxu0 0
        %1895 = vmatpush1.bf16.msra.mxu0 0
        %1896 = vmatprep.subr.bf16.mxu0 0
        %1897 = vmatpush1.bf16.msra.mxu0 0
        %1898 = vmatprep.subr.bf16.mxu0 0
        %1899 = vmatpush1.bf16.msra.mxu0 0
        %1900 = vmatprep.subr.bf16.mxu0 0
        %1901 = vmatpush1.bf16.msra.mxu0 0
        %1902 = vmatprep.subr.bf16.mxu0 0
        %1903 = vmatpush1.bf16.msra.mxu0 0
        %1904 = vmatprep.subr.bf16.mxu0 0
        %1905 = vmatpush1.bf16.msra.mxu0 0
        %1906 = vmatprep.mubr.bf16.mxu0 0
        %1907 = vmatmul.mubr.bf16.gmra.mrb[0].mxu0 %v1872
        %v1908 = vpop.f32.mrb[0].mxu0
        %v1909 = vadd.f32 %v1858, %v1908
        %v1910 = vpop.f32.mrb[0].mxu0
        %v1911 = vpop.f32.mrb[0].mxu0
        %v1912 = vadd.f32 %v1858, %v1911
        %v1913 = vpop.f32.mrb[0].mxu0
        %1914 = vdwg.mxu0
        %v1915 = vlaneseq
        %v1916 = vshrl.u32 %v1915, 7
        %v1917 = vsub.s32 3, %v1916
        %v1918 = vrot.slane %v364, %v1917
        %v1919 = vmul.f32 %v1918, %v1909
        %v1920 = vmul.f32 %v1918, %v1912
        %v1921 = vadd.f32 %v362, %v1919
        %v1922 = vadd.f32 %v363, %v1920
        %v1923 = vsel %vm366, %v1921, 0.0
        %1924 = vadd.xlane.f32.xlu0 %v1923
        %v1925 = vpop.xlane.xlu0 %1924
        %v1926 = vsel %vm366, %v1922, 0.0
        %1927 = vadd.xlane.f32.xlu0 %v1926
        %v1928 = vpop.xlane.xlu0 %1927
        %v1929 = vmul.f32 %v1925, %v373
        %v1930 = vmul.f32 %v1928, %v373
        %v1931 = vsub.f32 %v1921, %v1929
        %v1932 = vsub.f32 %v1922, %v1930
        %v1933 = vmul.f32 %v1931, %v1931
        %v1934 = vmul.f32 %v1932, %v1932
        %v1935 = vsel %vm366, %v1933, 0.0
        %1936 = vadd.xlane.f32.xlu0 %v1935
        %v1937 = vpop.xlane.xlu0 %1936
        %v1938 = vsel %vm366, %v1934, 0.0
        %1939 = vadd.xlane.f32.xlu0 %v1938
        %v1940 = vpop.xlane.xlu0 %1939
        %v1941 = vmul.f32 %v1937, %v373
        %v1942 = vmul.f32 %v1940, %v373
        %v1943 = vadd.f32 %v1941, 1e-05
        %v1944 = vadd.f32 %v1942, 1e-05
        %v1945 = vrsqrt.pop %v1943
        %v1946 = vrsqrt.pop %v1944
        %v1947 = vmul.f32 %v1931, %v1945
        %v1948 = vmul.f32 %v1932, %v1946
        %v1949 = vlaneseq
        %v1950 = vshrl.u32 %v1949, 7
        %v1951 = vsub.s32 4, %v1950
        %v1952 = vrot.slane %v364, %v1951
        %v1953 = vmul.f32 %v1947, %v1952
        %v1954 = vmul.f32 %v1948, %v1952
        %v1955 = vlaneseq
        %v1956 = vshrl.u32 %v1955, 7
        %v1957 = vsub.s32 5, %v1956
        %v1958 = vrot.slane %v364, %v1957
        %v1959 = vadd.f32 %v1953, %v1958
        %v1960 = vadd.f32 %v1954, %v1958
        %v1961 = vpack.c.bf16 %v1960, %v1959
        %v1962 = vld [vmem:[#allocation7] sm:$0xf]
        %v1963 = vld [vmem:[#allocation7 + $0x4] sm:$0xf]
        %v1964 = vld [vmem:[#allocation7 + $0x8] sm:$0xf]
        %v1965 = vld [vmem:[#allocation7 + $0xc] sm:$0xf]
        %v1967 = vlaneseq
        %v1968 = vshrl.u32 %v1967, 7
        %v1969 = vsub.s32 0, %v1968
        %v1970 = vrot.slane %v365, %v1969
        %v1976 = vunpack.c.l.b16 %v1962
        %v1977 = vunpack.c.l.b16 %v1963
        %v1978 = vunpack.c.l.b16 %v1964
        %v1979 = vunpack.c.l.b16 %v1965
        %v1980 = vpack.c.b16 %v1977, %v1976
        %v1981 = vpack.c.b16 %v1979, %v1978
        %v1985 = vsel %vm366, %v1961, 0
        %1987 = vmatprep.subr.bf16.mxu0 0
        %1988 = vmatpush1.bf16.msra.mxu0 %v1980
        %1989 = vmatprep.subr.bf16.mxu0 0
        %1990 = vmatpush1.bf16.msra.mxu0 %v1981
        %1991 = vmatprep.subr.bf16.mxu0 0
        %1992 = vmatpush1.bf16.msra.mxu0 0
        %1993 = vmatprep.subr.bf16.mxu0 0
        %1994 = vmatpush1.bf16.msra.mxu0 0
        %1995 = vmatprep.subr.bf16.mxu0 0
        %1996 = vmatpush1.bf16.msra.mxu0 0
        %1997 = vmatprep.subr.bf16.mxu0 0
        %1998 = vmatpush1.bf16.msra.mxu0 0
        %1999 = vmatprep.subr.bf16.mxu0 0
        %2000 = vmatpush1.bf16.msra.mxu0 0
        %2001 = vmatprep.subr.bf16.mxu0 0
        %2002 = vmatpush1.bf16.msra.mxu0 0
        %2003 = vmatprep.subr.bf16.mxu0 0
        %2004 = vmatpush1.bf16.msra.mxu0 0
        %2005 = vmatprep.subr.bf16.mxu0 0
        %2006 = vmatpush1.bf16.msra.mxu0 0
        %2007 = vmatprep.subr.bf16.mxu0 0
        %2008 = vmatpush1.bf16.msra.mxu0 0
        %2009 = vmatprep.subr.bf16.mxu0 0
        %2010 = vmatpush1.bf16.msra.mxu0 0
        %2011 = vmatprep.subr.bf16.mxu0 0
        %2012 = vmatpush1.bf16.msra.mxu0 0
        %2013 = vmatprep.subr.bf16.mxu0 0
        %2014 = vmatpush1.bf16.msra.mxu0 0
        %2015 = vmatprep.subr.bf16.mxu0 0
        %2016 = vmatpush1.bf16.msra.mxu0 0
        %2017 = vmatprep.subr.bf16.mxu0 0
        %2018 = vmatpush1.bf16.msra.mxu0 0
        %2019 = vmatprep.mubr.bf16.mxu0 0
        %2020 = vmatmul.mubr.bf16.gmra.mrb[0].mxu0 %v1985
        %v2021 = vpop.f32.mrb[0].mxu0
        %v2022 = vadd.f32 %v1970, %v2021
        %v2023 = vpop.f32.mrb[0].mxu0
        %v2024 = vpop.f32.mrb[0].mxu0
        %v2025 = vadd.f32 %v1970, %v2024
        %v2026 = vpop.f32.mrb[0].mxu0
        %2027 = vdwg.mxu0
        %v2028 = vmul.f32 %v2022, 0.5
        %v2029 = vmul.f32 %v2025, 0.5
        %v2030 = vmul.f32 %v2022, 0.044715
        %v2031 = vmul.f32 %v2025, 0.044715
        %v2032 = vmul.f32 %v2030, %v2022
        %v2033 = vmul.f32 %v2031, %v2025
        %v2034 = vmul.f32 %v2032, %v2022
        %v2035 = vmul.f32 %v2033, %v2025
        %v2036 = vadd.f32 %v2022, %v2034
        %v2037 = vadd.f32 %v2025, %v2035
        %v2038 = vmul.f32 %v2036, 0.7978846
        %v2039 = vmul.f32 %v2037, 0.7978846
        %v2040 = vtanh.pop %v2038
        %v2041 = vtanh.pop %v2039
        %v2042 = vadd.f32 %v2040, 1.0
        %v2043 = vadd.f32 %v2041, 1.0
        %v2044 = vmul.f32 %v2028, %v2042
        %v2045 = vmul.f32 %v2029, %v2043
        %v2046 = vpack.c.bf16 %v2045, %v2044
        %v2047 = vld [vmem:[%s5] sm:$0xf]
        %v2048 = vld [vmem:[%s5 + $0x4] sm:$0xf]
        %v2049 = vld [vmem:[%s5 + $0x8] sm:$0xf]
        %v2050 = vld [vmem:[%s5 + $0xc] sm:$0xf]
        %v2051 = vld [vmem:[%s5 + $0x10] sm:$0xf]
        %v2052 = vld [vmem:[%s5 + $0x14] sm:$0xf]
        %v2053 = vld [vmem:[%s5 + $0x18] sm:$0xf]
        %v2054 = vld [vmem:[%s5 + $0x1c] sm:$0xf]
        %v2055 = vld [vmem:[%s5 + $0x20] sm:$0xf]
        %v2056 = vld [vmem:[%s5 + $0x24] sm:$0xf]
        %v2057 = vld [vmem:[%s5 + $0x28] sm:$0xf]
        %v2058 = vld [vmem:[%s5 + $0x2c] sm:$0xf]
        %v2059 = vld [vmem:[%s5 + $0x30] sm:$0xf]
        %v2060 = vld [vmem:[%s5 + $0x34] sm:$0xf]
        %v2061 = vld [vmem:[%s5 + $0x38] sm:$0xf]
        %v2062 = vld [vmem:[%s5 + $0x3c] sm:$0xf]
        %v2063 = vlaneseq
        %v2064 = vshrl.u32 %v2063, 7
        %v2065 = vsub.s32 6, %v2064
        %v2066 = vrot.slane %v364, %v2065
        %v2083 = vunpack.c.l.b16 %v2047
        %v2084 = vunpack.c.l.b16 %v2048
        %v2085 = vunpack.c.l.b16 %v2049
        %v2086 = vunpack.c.l.b16 %v2050
        %v2087 = vunpack.c.l.b16 %v2051
        %v2088 = vunpack.c.l.b16 %v2052
        %v2089 = vunpack.c.l.b16 %v2053
        %v2090 = vunpack.c.l.b16 %v2054
        %v2091 = vunpack.c.l.b16 %v2055
        %v2092 = vunpack.c.l.b16 %v2056
        %v2093 = vunpack.c.l.b16 %v2057
        %v2094 = vunpack.c.l.b16 %v2058
        %v2095 = vunpack.c.l.b16 %v2059
        %v2096 = vunpack.c.l.b16 %v2060
        %v2097 = vunpack.c.l.b16 %v2061
        %v2098 = vunpack.c.l.b16 %v2062
        %v2099 = vpack.c.b16 %v2084, %v2083
        %v2100 = vpack.c.b16 %v2086, %v2085
        %v2101 = vpack.c.b16 %v2088, %v2087
        %v2102 = vpack.c.b16 %v2090, %v2089
        %v2103 = vpack.c.b16 %v2092, %v2091
        %v2104 = vpack.c.b16 %v2094, %v2093
        %v2105 = vpack.c.b16 %v2096, %v2095
        %v2106 = vpack.c.b16 %v2098, %v2097
        %2115 = vmatprep.subr.bf16.mxu0 0
        %2116 = vmatpush1.bf16.msra.mxu0 %v2099
        %2117 = vmatprep.subr.bf16.mxu0 0
        %2118 = vmatpush1.bf16.msra.mxu0 %v2100
        %2119 = vmatprep.subr.bf16.mxu0 0
        %2120 = vmatpush1.bf16.msra.mxu0 %v2101
        %2121 = vmatprep.subr.bf16.mxu0 0
        %2122 = vmatpush1.bf16.msra.mxu0 %v2102
        %2123 = vmatprep.subr.bf16.mxu0 0
        %2124 = vmatpush1.bf16.msra.mxu0 %v2103
        %2125 = vmatprep.subr.bf16.mxu0 0
        %2126 = vmatpush1.bf16.msra.mxu0 %v2104
        %2127 = vmatprep.subr.bf16.mxu0 0
        %2128 = vmatpush1.bf16.msra.mxu0 %v2105
        %2129 = vmatprep.subr.bf16.mxu0 0
        %2130 = vmatpush1.bf16.msra.mxu0 %v2106
        %2131 = vmatprep.subr.bf16.mxu0 0
        %2132 = vmatpush1.bf16.msra.mxu0 0
        %2133 = vmatprep.subr.bf16.mxu0 0
        %2134 = vmatpush1.bf16.msra.mxu0 0
        %2135 = vmatprep.subr.bf16.mxu0 0
        %2136 = vmatpush1.bf16.msra.mxu0 0
        %2137 = vmatprep.subr.bf16.mxu0 0
        %2138 = vmatpush1.bf16.msra.mxu0 0
        %2139 = vmatprep.subr.bf16.mxu0 0
        %2140 = vmatpush1.bf16.msra.mxu0 0
        %2141 = vmatprep.subr.bf16.mxu0 0
        %2142 = vmatpush1.bf16.msra.mxu0 0
        %2143 = vmatprep.subr.bf16.mxu0 0
        %2144 = vmatpush1.bf16.msra.mxu0 0
        %2145 = vmatprep.subr.bf16.mxu0 0
        %2146 = vmatpush1.bf16.msra.mxu0 0
        %2147 = vmatprep.mubr.bf16.mxu0 0
        %2148 = vmatmul.mubr.bf16.gmra.mrb[0].mxu0 %v2046
        %v2149 = vpop.f32.mrb[0].mxu0
        %v2150 = vadd.f32 %v2066, %v2149
        %v2151 = vpop.f32.mrb[0].mxu0
        %v2152 = vpop.f32.mrb[0].mxu0
        %v2153 = vadd.f32 %v2066, %v2152
        %v2154 = vpop.f32.mrb[0].mxu0
        %2155 = vdwg.mxu0
        %v2156 = vlaneseq
        %v2157 = vshrl.u32 %v2156, 7
        %v2158 = vsub.s32 7, %v2157
        %v2159 = vrot.slane %v364, %v2158
        %v2160 = vmul.f32 %v2159, %v2150
        %v2161 = vmul.f32 %v2159, %v2153
        %v2162 = vadd.f32 %v1921, %v2160
        %v2163 = vadd.f32 %v1922, %v2161
        %2164 = vst.msk [vmem:[%s355] sm:$0xff] %vm366, %v2162
        %2165 = vst.msk [vmem:[%s355 + $0x8] sm:$0xff] %vm366, %v2163
        %s2166 = sand.u32 %s206, 1
        %s2167 = scalar_lea.sflag [#allocation4], %s2166
        %s2168 = sand.u32 %s206, 1
        %s2169 = smul.addr %s2168, 16
        %s2170 = scalar_lea.vmem [#allocation10], %s2169
        // Predicated region
        $region69: #{tpu_custom_call.1} parent=51 // pred_check
          %p2171 = pneg %p216
        $region70: #{tpu_custom_call.1} parent=51 // pred_check_branch
          %2173 = sbr.rel (%p2171) target = $region72
        $region71: #{tpu_custom_call.1} parent=51 // pred_region
          %s2175 = ssub.s32 256, 256
          %2176 = vsyncadd %s2167, %s2175
          %s2177 = smul.addr %s25, 2
          %s2178 = smul.addr %s2177, 128
          %s2179 = scalar_lea.hbm %s8, %s2178
          %s2180 = sshll.u32 %s2170, 4
          %s2181 = int_to_ptr.vmem [resolvable:$true] %s2180
          %2186 = dma.vmem_to_hbm [thread:$0]  %s2181, 256, %s2179, %s2167, 128, 128, 8
        $region72: #{tpu_custom_call.1} parent=51 // pred_fallthru
          _
      $region52: #{tpu_custom_call.1} parent=5 // pred_fallthru
        _
      %p2187 = scmp.le.s32.totalorder 2, %s20
      // Predicated region
      $region73: #{tpu_custom_call.1} parent=5 // pred_check
        %p2188 = pneg %p2187
      $region74: #{tpu_custom_call.1} parent=5 // pred_check_branch
        %2190 = sbr.rel (%p2188) target = $region76
      $region75: #{tpu_custom_call.1} parent=5 // pred_region
        %s2191 = ssub.s32 %s20, 2
        // Predicated region
        $region77: #{tpu_custom_call.1} parent=75 // pred_check
          %p2192 = pneg %p222
        $region78: #{tpu_custom_call.1} parent=75 // pred_check_branch
          %2194 = sbr.rel (%p2192) target = $region80
        $region79: #{tpu_custom_call.1} parent=75 // pred_region
          %s2195 = sand.u32 %s207, 1
          %s2196 = scalar_lea.sflag [#allocation4], %s2195
          %s2197 = sand.u32 %s207, 1
          %s2198 = smul.addr %s2197, 16
          %s2199 = scalar_lea.vmem [#allocation10], %s2198
          %2200 = dma.done %s2196, 256
        $region80: #{tpu_custom_call.1} parent=75 // pred_fallthru
          _
      $region76: #{tpu_custom_call.1} parent=5 // pred_fallthru
        _
    $region6: #{tpu_custom_call.1} parent=1 // loop_footer
      %s24 = sadd.s32 1, %s20
    $region7: #{tpu_custom_call.1} parent=1 // loop_footer_branch
      %19 = sbr.rel target = $region3
    $region8: #{tpu_custom_call.1} parent=1 // loop_exit
      _
    %2201 = vsyncpa [#allocation3], 1
    %s2202 = scalar_lea.sflag [#allocation3], 1
    %2203 = vsyncpa %s2202, 1
    %2204 = vsyncpa [#allocation6], 1
    %2205 = vsyncpa [#allocation9], 1
    %2206 = vsyncpa [#allocation4], 1
    %s2207 = scalar_lea.sflag [#allocation4], 1
    %2208 = vsyncpa %s2207, 1

</llo_original>
